<compile_context>
chip_gen: v7x
topology: tpu7x:2x2x1
jax: 0.10.0
libtpu: 0.0.40
codegen_flags: <defaults>
</compile_context>

<pallas_src>
import functools

import jax
import jax.numpy as jnp
import numpy as np
from jax import lax
from jax.experimental import pallas as pl
from jax.experimental.pallas import tpu as pltpu

TILE = 128                       # node tile (dst rows / src rows / projection rows)
LANE = 128                       # lane-padding unit for every output width
_NEG = -1e30
_VMEM_LIMIT = 32 * 1024 * 1024   # explicit scoped-VMEM limit (>= default on all gens)


def _round_up(v, m):
    return (v + m - 1) // m * m


# ------------------------------- projection kernel -------------------------------

def _proj_kernel(x_ref, wp_ref, wa_ref, xw_ref, adst_ref, asrct_ref, *, heads):
    """Fused all-head projection + folded attention-vector reductions for one node tile."""
    x = x_ref[...]
    # All heads in one lane-dense bf16 MXU matmul (values path).
    xw_ref[...] = jnp.dot(x.astype(jnp.bfloat16), wp_ref[...],
                          preferred_element_type=jnp.float32).astype(xw_ref.dtype)
    # Attention-score per-node terms in f32 (tiny matmul; keeps the logit path accurate).
    att = jnp.dot(x.astype(jnp.float32), wa_ref[...],
                  preferred_element_type=jnp.float32,
                  precision=lax.Precision.HIGHEST)                    # [Tn, 128]
    adst_ref[...] = att[:, :heads]
    att_t = att.T                                                     # one 128x128 transpose
    src_off = _round_up(heads, 8)
    asrct_ref[...] = att_t[src_off:src_off + heads, :]                # [H, Tn]


def _gat_project(x, w_proj, w_att, heads):
    n_pad, fin = x.shape
    hc_pad = w_proj.shape[1]
    return pl.pallas_call(
        functools.partial(_proj_kernel, heads=heads),
        out_shape=(
            jax.ShapeDtypeStruct((n_pad, hc_pad), jnp.bfloat16),      # xw (values)
            jax.ShapeDtypeStruct((n_pad, heads), jnp.float32),        # a_dst . (x W_h)
            jax.ShapeDtypeStruct((heads, n_pad), jnp.float32),        # a_src . (x W_h), transposed
        ),
        grid=(n_pad // TILE,),
        in_specs=[
            pl.BlockSpec((TILE, fin), lambda n: (n, 0)),
            pl.BlockSpec((fin, hc_pad), lambda n: (0, 0)),
            pl.BlockSpec((fin, LANE), lambda n: (0, 0)),
        ],
        out_specs=(
            pl.BlockSpec((TILE, hc_pad), lambda n: (n, 0)),
            pl.BlockSpec((TILE, heads), lambda n: (n, 0)),
            pl.BlockSpec((heads, TILE), lambda n: (0, n)),
        ),
        compiler_params=pltpu.CompilerParams(
            dimension_semantics=("parallel",),
            vmem_limit_bytes=_VMEM_LIMIT),
    )(x, w_proj, w_att)


# ------------------------------- attention kernel --------------------------------

def _attn_kernel(adst_ref, asrct_ref, xw_ref, mask_ref, bias_ref, exp_ref, o_ref,
                 m_sc, l_sc, acc_sc, *, heads, out_ph, apply_elu):
    """Flash-tiled GAT attention: one (dst_tile, src_tile) step with online softmax."""
    j = pl.program_id(1)

    @pl.when(j == 0)
    def _():
        m_sc[...] = jnp.full_like(m_sc, _NEG)
        l_sc[...] = jnp.zeros_like(l_sc)
        acc_sc[...] = jnp.zeros_like(acc_sc)

    adst = adst_ref[...]                           # [Td, H]   f32
    asrct = asrct_ref[...]                         # [H, Ts]   f32
    xw = xw_ref[...]                               # [Ts, HCp] bf16
    maskf = mask_ref[...].astype(jnp.float32)      # [Td, Ts]  1.0 edge / 0.0 non-edge
    edge = maskf > 0.0

    for h in range(heads):                         # static unroll (H = 8 / 2)
        s = adst[:, h:h + 1] + asrct[h:h + 1, :]                       # [Td, Ts]
        s = jnp.where(s > 0, s, 0.2 * s)                               # LeakyReLU(0.2)
        s = jnp.where(edge, s, _NEG)                                   # mask (no f32 bias input)
        m_prev = m_sc[:, h:h + 1]
        m_new = jnp.maximum(m_prev, jnp.max(s, axis=-1, keepdims=True))
        scale = jnp.exp(m_prev - m_new)                                # [Td, 1]
        p = jnp.exp(s - m_new) * maskf                                 # masked -> exactly 0
        l_sc[:, h:h + 1] = scale * l_sc[:, h:h + 1] + jnp.sum(p, axis=-1, keepdims=True)
        m_sc[:, h:h + 1] = m_new
        c0, c1 = h * out_ph, (h + 1) * out_ph
        acc_sc[:, c0:c1] = scale * acc_sc[:, c0:c1] + jnp.dot(
            p.astype(jnp.bfloat16), xw[:, c0:c1], preferred_element_type=jnp.float32)

    @pl.when(j == pl.num_programs(1) - 1)
    def _():
        inv = pl.reciprocal(l_sc[...], approx=False)                   # [Td, H], EUP
        inv_full = jnp.dot(inv, exp_ref[...],                          # head -> lane broadcast
                           preferred_element_type=jnp.float32,
                           precision=lax.Precision.HIGHEST)            # [Td, HCp]
        out = acc_sc[...] * inv_full + bias_ref[...]
        if apply_elu:
            out = jnp.where(out > 0, out, jnp.exp(jnp.minimum(out, 0.0)) - 1.0)
        o_ref[...] = out.astype(o_ref.dtype)                           # one lane-dense store


def _gat_attend(adst, asrct, xw, mask, bias_pad, expand, *, heads, out_ph,
                apply_elu, out_dtype):
    n_pad, hc_pad = xw.shape
    grid = (n_pad // TILE, n_pad // TILE)
    return pl.pallas_call(
        functools.partial(_attn_kernel, heads=heads, out_ph=out_ph, apply_elu=apply_elu),
        out_shape=jax.ShapeDtypeStruct((n_pad, hc_pad), out_dtype),
        grid=grid,
        in_specs=[
            pl.BlockSpec((TILE, heads), lambda i, j: (i, 0)),      # a_dst   (dst tile)
            pl.BlockSpec((heads, TILE), lambda i, j: (0, j)),      # a_src^T (src tile)
            pl.BlockSpec((TILE, hc_pad), lambda i, j: (j, 0)),     # values  (src tile)
            pl.BlockSpec((TILE, TILE), lambda i, j: (i, j)),       # int8 adjacency mask tile
            pl.BlockSpec((1, hc_pad), lambda i, j: (0, 0)),        # bias (padded concat layout)
            pl.BlockSpec((heads, hc_pad), lambda i, j: (0, 0)),    # head->lane expand matrix
        ],
        out_specs=pl.BlockSpec((TILE, hc_pad), lambda i, j: (i, 0)),
        scratch_shapes=[
            pltpu.VMEM((TILE, heads), jnp.float32),    # m (running max)
            pltpu.VMEM((TILE, heads), jnp.float32),    # l (running denom)
            pltpu.VMEM((TILE, hc_pad), jnp.float32),   # acc
        ],
        compiler_params=pltpu.CompilerParams(
            dimension_semantics=("parallel", "arbitrary"),
            vmem_limit_bytes=_VMEM_LIMIT),
    )(adst, asrct, xw, mask, bias_pad, expand)


# --------------------------------- model wrapper ---------------------------------

def _prepare_layer(w, att_src, att_dst, bias, fin_pad):
    """Precompute (once, at setup) the fused / padded weight operands for one GATConv."""
    H, fin, C = w.shape
    hc_pad = _round_up(H * C, LANE)
    src_off = _round_up(H, 8)

    w_flat = jnp.transpose(w, (1, 0, 2)).reshape(fin, H * C)                # [Fin, H*C]
    w_proj = jnp.zeros((fin_pad, hc_pad), jnp.float32)
    w_proj = w_proj.at[:fin, :H * C].set(w_flat).astype(jnp.bfloat16)

    a_dst_cols = jnp.einsum("hfc,hc->fh", w, att_dst[:, 0, :])              # [Fin, H]
    a_src_cols = jnp.einsum("hfc,hc->fh", w, att_src[:, 0, :])              # [Fin, H]
    w_att = jnp.zeros((fin_pad, LANE), jnp.float32)
    w_att = w_att.at[:fin, :H].set(a_dst_cols)
    w_att = w_att.at[:fin, src_off:src_off + H].set(a_src_cols)

    bias_pad = jnp.zeros((1, hc_pad), jnp.float32)
    bias_pad = bias_pad.at[0, :H * C].set(bias[:, 0, :].reshape(H * C))

    expand = np.zeros((H, hc_pad), np.float32)                              # head -> lanes
    for h in range(H):
        expand[h, h * C:(h + 1) * C] = 1.0

    return dict(w_proj=w_proj, w_att=w_att, bias=bias_pad,
                expand=jnp.asarray(expand), heads=H, out_ph=C, hc_pad=hc_pad)


def prepare_model(params):
    l1 = _prepare_layer(params["w1"], params["as1"], params["ad1"], params["b1"],
                        fin_pad=params["w1"].shape[1])
    l2 = _prepare_layer(params["w2"], params["as2"], params["ad2"], params["b2"],
                        fin_pad=l1["hc_pad"])
    return dict(l1=l1, l2=l2)


def gat_layer(x, mask, lp, *, apply_elu, out_dtype):
    xw, adst, asrct = _gat_project(x, lp["w_proj"], lp["w_att"], lp["heads"])
    return _gat_attend(adst, asrct, xw, mask, lp["bias"], lp["expand"],
                       heads=lp["heads"], out_ph=lp["out_ph"],
                       apply_elu=apply_elu, out_dtype=out_dtype)


def gat_graph_model(x_pad, mask_pad, prepared):
    """Eval-mode forward: dropout(id) -> elu(gat1) -> dropout(id) -> gat2."""
    h = gat_layer(x_pad, mask_pad, prepared["l1"], apply_elu=True,
                  out_dtype=jnp.bfloat16)               # layer-1 output stays bf16
    return gat_layer(h, mask_pad, prepared["l2"], apply_elu=False,
                     out_dtype=jnp.float32)


# ----------------------------- params / graph helpers ----------------------------

def _glorot(key, shape):
    fan_in, fan_out = shape[-2], shape[-1]
    lim = np.sqrt(6.0 / (fan_in + fan_out))
    return jax.random.uniform(key, shape, jnp.float32, -lim, lim)


def make_params(key, input_dim, hidden_dim, heads):
    k = jax.random.split(key, 8)
    C1, H1 = hidden_dim, heads
    C2, H2 = hidden_dim, 2
    in2 = hidden_dim * heads
    return {
        "w1":  _glorot(k[0], (H1, input_dim, C1)),
        "as1": _glorot(k[1], (H1, 1, C1)),
        "ad1": _glorot(k[2], (H1, 1, C1)),
        "b1":  jnp.zeros((H1, 1, C1), jnp.float32),
        "w2":  _glorot(k[3], (H2, in2, C2)),
        "as2": _glorot(k[4], (H2, 1, C2)),
        "ad2": _glorot(k[5], (H2, 1, C2)),
        "b2":  jnp.zeros((H2, 1, C2), jnp.float32),
    }


def edge_index_to_adj(edge_index, num_nodes):
    """Dense adjacency mask adj[dst, src] with self-loops (PyG add_self_loops=True)."""
    src, dst = edge_index[0], edge_index[1]
    adj = jnp.zeros((num_nodes, num_nodes), jnp.float32)
    adj = adj.at[dst, src].set(1.0)
    adj = jnp.maximum(adj, jnp.eye(num_nodes, dtype=jnp.float32))
    return adj


def _reference(x, adj, params):
    """Pure-JAX f32 reference of the same dense-GAT math (for the correctness check)."""
    def layer(x, w, a_s, a_d, b, apply_elu):
        H, Fin, C = w.shape
        outs = []
        for h in range(H):
            xw = x @ w[h]
            es = jnp.sum(xw * a_s[h], axis=-1, keepdims=True)
            ed = jnp.sum(xw * a_d[h], axis=-1, keepdims=True)
            e = ed + es.T
            e = jnp.where(e > 0, e, 0.2 * e)
            mask = adj > 0
            e = jnp.where(mask, e, -1e30)
            p = jnp.exp(e - jnp.max(e, axis=-1, keepdims=True))
            p = jnp.where(mask, p, 0.0)
            attn = p / jnp.sum(p, axis=-1, keepdims=True)
            o = attn @ xw + b[h]
            if apply_elu:
                o = jnp.where(o > 0, o, jnp.exp(o) - 1.0)
            outs.append(o)
        return jnp.concatenate(outs, axis=-1)
    h = layer(x, params["w1"], params["as1"], params["ad1"], params["b1"], True)
    return layer(h, params["w2"], params["as2"], params["ad2"], params["b2"], False)


if __name__ == "__main__":
    # GATGraphModel(input_dim=16, hidden_dim=8, heads=8) on an 8-node graph -> output [8, 16]
    N, input_dim, hidden_dim, heads = 8, 16, 8, 8

    key = jax.random.PRNGKey(0)
    kx, ke1, ke2, kp = jax.random.split(key, 4)
    x = jax.random.normal(kx, (N, input_dim), jnp.float32)
    src = jax.random.randint(ke1, (24,), 0, N)
    dst = jax.random.randint(ke2, (24,), 0, N)
    edge_index = jnp.stack([src, dst])
    adj = edge_index_to_adj(edge_index, N)

    params = make_params(kp, input_dim, hidden_dim, heads)
    prepared = prepare_model(params)          # fused weights precomputed once

    # Pad nodes up to the tile size; fake nodes get a self-loop so their (discarded)
    # softmax rows stay finite.  The adjacency ships as int8 (4x less HBM/VMEM than f32).
    n_pad = _round_up(N, TILE)
    x_pad = jnp.zeros((n_pad, input_dim), jnp.float32).at[:N].set(x)
    mask = jnp.zeros((n_pad, n_pad), jnp.float32).at[:N, :N].set(adj)
    mask = jnp.maximum(mask, jnp.eye(n_pad, dtype=jnp.float32)).astype(jnp.int8)

    out_pad = jax.block_until_ready(gat_graph_model(x_pad, mask, prepared))
    out = np.asarray(out_pad)[:N, :hidden_dim * 2]

    ref = np.asarray(_reference(x, adj, params))
    assert out.shape == (N, hidden_dim * 2), out.shape
    # bf16 is used only on the value path (projection / aggregation matmuls); the attention
    # logit path and normalization stay f32, so a much tighter tolerance than before holds.
    np.testing.assert_allclose(out, ref, rtol=5e-2, atol=5e-2)
    print("KERNEL_OK")
</pallas_src>

<mosaic_0001>
module attributes {stable_mosaic.version = 11 : i64} {
  func.func @_proj_kernel(%arg0: i32, %arg1: memref<128x16xf32, #tpu.memory_space<vmem>>, %arg2: memref<16x128xbf16, #tpu.memory_space<vmem>>, %arg3: memref<16x128xf32, #tpu.memory_space<vmem>>, %arg4: memref<128x128xbf16, #tpu.memory_space<vmem>>, %arg5: memref<128x8xf32, #tpu.memory_space<vmem>>, %arg6: memref<8x128xf32, #tpu.memory_space<vmem>>) attributes {dimension_semantics = [#tpu.dimension_semantics<parallel>], iteration_bounds = array<i64: 1>, scalar_prefetch = 0 : i64, scratch_operands = 0 : i64, tpu.core_type = #tpu.core_type<tc>, window_params = [{transform_indices = @transform_0, window_bounds = array<i64: 128, 16>}, {pipeline_mode = #tpu.pipeline_mode<synchronous>, transform_indices = @transform_1, window_bounds = array<i64: 16, 128>}, {pipeline_mode = #tpu.pipeline_mode<synchronous>, transform_indices = @transform_2, window_bounds = array<i64: 16, 128>}, {transform_indices = @transform_3, window_bounds = array<i64: 128, 128>}, {transform_indices = @transform_4, window_bounds = array<i64: 128, 8>}, {transform_indices = @transform_5, window_bounds = array<i64: 8, 128>}]} {
    %c0 = arith.constant 0 : index
    %c0_0 = arith.constant 0 : index
    %0 = vector.load %arg1[%c0, %c0_0] : memref<128x16xf32, #tpu.memory_space<vmem>>, vector<128x16xf32>
    %1 = arith.truncf %0 : vector<128x16xf32> to vector<128x16xbf16>
    %c0_1 = arith.constant 0 : index
    %c0_2 = arith.constant 0 : index
    %2 = vector.load %arg2[%c0_1, %c0_2] : memref<16x128xbf16, #tpu.memory_space<vmem>>, vector<16x128xbf16>
    %cst = arith.constant dense<0.000000e+00> : vector<128x128xf32>
    %3 = tpu.matmul %1, %2, %cst {dimension_numbers = #tpu.dot_dimension_numbers<[1], [0], [0], [1], [0, 0, 1, 1], [], []>} : vector<128x16xbf16>, vector<16x128xbf16>, vector<128x128xf32> -> vector<128x128xf32>
    %4 = arith.truncf %3 : vector<128x128xf32> to vector<128x128xbf16>
    %c0_3 = arith.constant 0 : index
    %c0_4 = arith.constant 0 : index
    %5 = vector.load %arg4[%c0_3, %c0_4] : memref<128x128xbf16, #tpu.memory_space<vmem>>, vector<128x128xbf16>
    tpu.vector_store %arg4[%c0_3, %c0_4], %4 {strides = array<i32>} : memref<128x128xbf16, #tpu.memory_space<vmem>>, vector<128x128xbf16>,
    %c0_5 = arith.constant 0 : index
    %c0_6 = arith.constant 0 : index
    %6 = vector.load %arg3[%c0_5, %c0_6] : memref<16x128xf32, #tpu.memory_space<vmem>>, vector<16x128xf32>
    %cst_7 = arith.constant dense<0.000000e+00> : vector<128x128xf32>
    %7 = tpu.matmul %0, %6, %cst_7 {dimension_numbers = #tpu.dot_dimension_numbers<[1], [0], [0], [1], [0, 0, 1, 1], [], []>, precision = #tpu.contract_precision<fp32>} : vector<128x16xf32>, vector<16x128xf32>, vector<128x128xf32> -> vector<128x128xf32>
    %8 = vector.extract_strided_slice %7 {offsets = [0, 0], sizes = [128, 8], strides = [1, 1]} : vector<128x128xf32> to vector<128x8xf32>
    %c0_8 = arith.constant 0 : index
    %c0_9 = arith.constant 0 : index
    %9 = vector.load %arg5[%c0_8, %c0_9] : memref<128x8xf32, #tpu.memory_space<vmem>>, vector<128x8xf32>
    tpu.vector_store %arg5[%c0_8, %c0_9], %8 {strides = array<i32>} : memref<128x8xf32, #tpu.memory_space<vmem>>, vector<128x8xf32>,
    %10 = tpu.transpose %7, [1, 0] : vector<128x128xf32> -> vector<128x128xf32>
    %11 = vector.extract_strided_slice %10 {offsets = [8, 0], sizes = [8, 128], strides = [1, 1]} : vector<128x128xf32> to vector<8x128xf32>
    %c0_10 = arith.constant 0 : index
    %c0_11 = arith.constant 0 : index
    %12 = vector.load %arg6[%c0_10, %c0_11] : memref<8x128xf32, #tpu.memory_space<vmem>>, vector<8x128xf32>
    tpu.vector_store %arg6[%c0_10, %c0_11], %11 {strides = array<i32>} : memref<8x128xf32, #tpu.memory_space<vmem>>, vector<8x128xf32>,
    return
  }
  func.func @transform_0(%arg0: i32) -> (i32, i32) {
    %c0_i32 = arith.constant 0 : i32
    %c0_i32_0 = arith.constant 0 : i32
    return %arg0, %c0_i32 : i32, i32
  }
  func.func @transform_1(%arg0: i32) -> (i32, i32) {
    %c0_i32 = arith.constant 0 : i32
    %c0_i32_0 = arith.constant 0 : i32
    %c0_i32_1 = arith.constant 0 : i32
    return %c0_i32, %c0_i32_0 : i32, i32
  }
  func.func @transform_2(%arg0: i32) -> (i32, i32) {
    %c0_i32 = arith.constant 0 : i32
    %c0_i32_0 = arith.constant 0 : i32
    %c0_i32_1 = arith.constant 0 : i32
    return %c0_i32, %c0_i32_0 : i32, i32
  }
  func.func @transform_3(%arg0: i32) -> (i32, i32) {
    %c0_i32 = arith.constant 0 : i32
    %c0_i32_0 = arith.constant 0 : i32
    return %arg0, %c0_i32 : i32, i32
  }
  func.func @transform_4(%arg0: i32) -> (i32, i32) {
    %c0_i32 = arith.constant 0 : i32
    %c0_i32_0 = arith.constant 0 : i32
    return %arg0, %c0_i32 : i32, i32
  }
  func.func @transform_5(%arg0: i32) -> (i32, i32) {
    %c0_i32 = arith.constant 0 : i32
    %c0_i32_0 = arith.constant 0 : i32
    return %c0_i32, %arg0 : i32, i32
  }
}

</mosaic_0001>

<llo_original>
// kernel: tpu_custom_call.1
$region0: #{tpu_custom_call.1}
  #allocation0 [shape = 'u32[]', space=smem, size = 0x4, offset = 0x4, fixed_abs, tag = 'smem constant byte address 0x4 - core index']
  #allocation1 [shape = 'u32[144,128]{1,0:T(1,128)}', space=vmem, size = 0x12000, scoped, tag = 'internal scratch']
  %s0 = inlined_call_operand.vmem [shape: f32[128,16], index: 0, kind: input, shape index: {}]
  %s1 = inlined_call_operand.vmem [shape: bf16[16,128], index: 1, kind: input, shape index: {}]
  %s2 = inlined_call_operand.vmem [shape: f32[16,128], index: 2, kind: input, shape index: {}]
  %s3 = inlined_call_operand.hbm [shape: bf16[128,128], index: 3, kind: output, shape index: {0}]
  %s4 = inlined_call_operand.vmem [shape: f32[128,8], index: 4, kind: output, shape index: {1}]
  %s5 = inlined_call_operand.hbm [shape: f32[8,128], index: 5, kind: output, shape index: {2}]
  %6 = xla_tuple %s3, %s4, %s5
  %s7 = sld [smem:[#allocation0]]
  $region38: #{tpu_custom_call.1} parent=0
    _
  %s9 = ssub.s32 1, %s7
  %s10 = scalar_select 0, %s9, %s7
  $region1: #{tpu_custom_call.1} parent=0
    #allocation2 [shape = 'u8[32768]{0}', space=vmem, size = 0x8000, scoped, tag = 'output window, operand 0, single buffered']
    #allocation3 [shape = 's32[1]{0}', space=sflag, size = 0x4, scoped, tag = 'scoped memory for tpu_custom_call.1']
    #allocation4 [shape = 'u8[4096]{0}', space=vmem, size = 0x1000, scoped, tag = 'output window, operand 2, single buffered']
    #allocation5 [shape = 's32[1]{0}', space=sflag, size = 0x4, scoped, tag = 'scoped memory for tpu_custom_call.1']
    %11 = vsyncpa [#allocation3], 0
    %12 = vsyncpa [#allocation5], 0
    // Predicated region
    $region2: #{tpu_custom_call.1} parent=1 // pred_check
      _
    $region3: #{tpu_custom_call.1} parent=1 // pred_check_branch
      %14 = sbr.rel (0) target = $region5
    $region4: #{tpu_custom_call.1} parent=1 // pred_region
      _
    $region5: #{tpu_custom_call.1} parent=1 // pred_fallthru
      _
    // Predicated region
    $region6: #{tpu_custom_call.1} parent=1 // pred_check
      _
    $region7: #{tpu_custom_call.1} parent=1 // pred_check_branch
      %16 = sbr.rel (0) target = $region9
    $region8: #{tpu_custom_call.1} parent=1 // pred_region
      _
    $region9: #{tpu_custom_call.1} parent=1 // pred_fallthru
      _
    // Predicated region
    $region10: #{tpu_custom_call.1} parent=1 // pred_check
      _
    $region11: #{tpu_custom_call.1} parent=1 // pred_check_branch
      %18 = sbr.rel (0) target = $region13
    $region12: #{tpu_custom_call.1} parent=1 // pred_region
      _
    $region13: #{tpu_custom_call.1} parent=1 // pred_fallthru
      _
    %v20 = vld [vmem:[%s0] sm:$0xff]
    %v21 = vld [vmem:[%s0 + $0x8] sm:$0xff]
    %v22 = vld [vmem:[%s0 + $0x10] sm:$0xff]
    %v23 = vld [vmem:[%s0 + $0x18] sm:$0xff]
    %v24 = vld [vmem:[%s0 + $0x20] sm:$0xff]
    %v25 = vld [vmem:[%s0 + $0x28] sm:$0xff]
    %v26 = vld [vmem:[%s0 + $0x30] sm:$0xff]
    %v27 = vld [vmem:[%s0 + $0x38] sm:$0xff]
    %v28 = vld [vmem:[%s0 + $0x40] sm:$0xff]
    %v29 = vld [vmem:[%s0 + $0x48] sm:$0xff]
    %v30 = vld [vmem:[%s0 + $0x50] sm:$0xff]
    %v31 = vld [vmem:[%s0 + $0x58] sm:$0xff]
    %v32 = vld [vmem:[%s0 + $0x60] sm:$0xff]
    %v33 = vld [vmem:[%s0 + $0x68] sm:$0xff]
    %v34 = vld [vmem:[%s0 + $0x70] sm:$0xff]
    %v35 = vld [vmem:[%s0 + $0x78] sm:$0xff]
    %v36 = vpack.c.bf16 %v21, %v20
    %v37 = vpack.c.bf16 %v23, %v22
    %v38 = vpack.c.bf16 %v25, %v24
    %v39 = vpack.c.bf16 %v27, %v26
    %v40 = vpack.c.bf16 %v29, %v28
    %v41 = vpack.c.bf16 %v31, %v30
    %v42 = vpack.c.bf16 %v33, %v32
    %v43 = vpack.c.bf16 %v35, %v34
    %v44 = vld [vmem:[%s1] sm:$0xf]
    %v45 = vld [vmem:[%s1 + $0x4] sm:$0xf]
    %v48 = vunpack.c.l.b16 %v44
    %v49 = vunpack.c.l.b16 %v45
    %v50 = vpack.c.b16 %v49, %v48
    %vm52 = vcmask 130048
    %v54 = vsel %vm52, %v36, 0
    %v57 = vsel %vm52, %v37, 0
    %v60 = vsel %vm52, %v38, 0
    %v63 = vsel %vm52, %v39, 0
    %v66 = vsel %vm52, %v40, 0
    %v69 = vsel %vm52, %v41, 0
    %v72 = vsel %vm52, %v42, 0
    %v75 = vsel %vm52, %v43, 0
    %77 = vmatprep.subr.bf16.mxu0 0
    %78 = vmatpush1.bf16.msra.mxu0 %v50
    %79 = vmatprep.subr.bf16.mxu0 0
    %80 = vmatpush1.bf16.msra.mxu0 0
    %81 = vmatprep.subr.bf16.mxu0 0
    %82 = vmatpush1.bf16.msra.mxu0 0
    %83 = vmatprep.subr.bf16.mxu0 0
    %84 = vmatpush1.bf16.msra.mxu0 0
    %85 = vmatprep.subr.bf16.mxu0 0
    %86 = vmatpush1.bf16.msra.mxu0 0
    %87 = vmatprep.subr.bf16.mxu0 0
    %88 = vmatpush1.bf16.msra.mxu0 0
    %89 = vmatprep.subr.bf16.mxu0 0
    %90 = vmatpush1.bf16.msra.mxu0 0
    %91 = vmatprep.subr.bf16.mxu0 0
    %92 = vmatpush1.bf16.msra.mxu0 0
    %93 = vmatprep.subr.bf16.mxu0 0
    %94 = vmatpush1.bf16.msra.mxu0 0
    %95 = vmatprep.subr.bf16.mxu0 0
    %96 = vmatpush1.bf16.msra.mxu0 0
    %97 = vmatprep.subr.bf16.mxu0 0
    %98 = vmatpush1.bf16.msra.mxu0 0
    %99 = vmatprep.subr.bf16.mxu0 0
    %100 = vmatpush1.bf16.msra.mxu0 0
    %101 = vmatprep.subr.bf16.mxu0 0
    %102 = vmatpush1.bf16.msra.mxu0 0
    %103 = vmatprep.subr.bf16.mxu0 0
    %104 = vmatpush1.bf16.msra.mxu0 0
    %105 = vmatprep.subr.bf16.mxu0 0
    %106 = vmatpush1.bf16.msra.mxu0 0
    %107 = vmatprep.subr.bf16.mxu0 0
    %108 = vmatpush1.bf16.msra.mxu0 0
    %109 = vmatprep.mubr.bf16.mxu0 0
    %110 = vmatmul.mubr.bf16.gmra.mrb[0].mxu0 %v54
    %v111 = vpop.f32.mrb[0].mxu0
    %v112 = vadd.f32 0.0, %v111
    %v113 = vpop.f32.mrb[0].mxu0
    %v114 = vpop.f32.mrb[0].mxu0
    %v115 = vadd.f32 0.0, %v114
    %v116 = vpop.f32.mrb[0].mxu0
    %117 = vmatprep.mubr.bf16.mxu0 0
    %118 = vmatmul.mubr.bf16.gmra.mrb[0].mxu0 %v57
    %v119 = vpop.f32.mrb[0].mxu0
    %v120 = vadd.f32 0.0, %v119
    %v121 = vpop.f32.mrb[0].mxu0
    %v122 = vpop.f32.mrb[0].mxu0
    %v123 = vadd.f32 0.0, %v122
    %v124 = vpop.f32.mrb[0].mxu0
    %125 = vmatprep.mubr.bf16.mxu0 0
    %126 = vmatmul.mubr.bf16.gmra.mrb[0].mxu0 %v60
    %v127 = vpop.f32.mrb[0].mxu0
    %v128 = vadd.f32 0.0, %v127
    %v129 = vpop.f32.mrb[0].mxu0
    %v130 = vpop.f32.mrb[0].mxu0
    %v131 = vadd.f32 0.0, %v130
    %v132 = vpop.f32.mrb[0].mxu0
    %133 = vmatprep.mubr.bf16.mxu0 0
    %134 = vmatmul.mubr.bf16.gmra.mrb[0].mxu0 %v63
    %v135 = vpop.f32.mrb[0].mxu0
    %v136 = vadd.f32 0.0, %v135
    %v137 = vpop.f32.mrb[0].mxu0
    %v138 = vpop.f32.mrb[0].mxu0
    %v139 = vadd.f32 0.0, %v138
    %v140 = vpop.f32.mrb[0].mxu0
    %141 = vmatprep.mubr.bf16.mxu0 0
    %142 = vmatmul.mubr.bf16.gmra.mrb[0].mxu0 %v66
    %v143 = vpop.f32.mrb[0].mxu0
    %v144 = vadd.f32 0.0, %v143
    %v145 = vpop.f32.mrb[0].mxu0
    %v146 = vpop.f32.mrb[0].mxu0
    %v147 = vadd.f32 0.0, %v146
    %v148 = vpop.f32.mrb[0].mxu0
    %149 = vmatprep.mubr.bf16.mxu0 0
    %150 = vmatmul.mubr.bf16.gmra.mrb[0].mxu0 %v69
    %v151 = vpop.f32.mrb[0].mxu0
    %v152 = vadd.f32 0.0, %v151
    %v153 = vpop.f32.mrb[0].mxu0
    %v154 = vpop.f32.mrb[0].mxu0
    %v155 = vadd.f32 0.0, %v154
    %v156 = vpop.f32.mrb[0].mxu0
    %157 = vmatprep.mubr.bf16.mxu0 0
    %158 = vmatmul.mubr.bf16.gmra.mrb[0].mxu0 %v72
    %v159 = vpop.f32.mrb[0].mxu0
    %v160 = vadd.f32 0.0, %v159
    %v161 = vpop.f32.mrb[0].mxu0
    %v162 = vpop.f32.mrb[0].mxu0
    %v163 = vadd.f32 0.0, %v162
    %v164 = vpop.f32.mrb[0].mxu0
    %165 = vmatprep.mubr.bf16.mxu0 0
    %166 = vmatmul.mubr.bf16.gmra.mrb[0].mxu0 %v75
    %v167 = vpop.f32.mrb[0].mxu0
    %v168 = vadd.f32 0.0, %v167
    %v169 = vpop.f32.mrb[0].mxu0
    %v170 = vpop.f32.mrb[0].mxu0
    %v171 = vadd.f32 0.0, %v170
    %v172 = vpop.f32.mrb[0].mxu0
    %173 = vdwg.mxu0
    %v174 = vpack.c.bf16 %v115, %v112
    %v175 = vpack.c.bf16 %v123, %v120
    %v176 = vpack.c.bf16 %v131, %v128
    %v177 = vpack.c.bf16 %v139, %v136
    %v178 = vpack.c.bf16 %v147, %v144
    %v179 = vpack.c.bf16 %v155, %v152
    %v180 = vpack.c.bf16 %v163, %v160
    %v181 = vpack.c.bf16 %v171, %v168
    %v190 = vunpack.c.l.b16 %v174
    %v191 = vunpack.c.h.b16 %v174
    %v192 = vunpack.c.l.b16 %v175
    %v193 = vunpack.c.h.b16 %v175
    %v194 = vunpack.c.l.b16 %v176
    %v195 = vunpack.c.h.b16 %v176
    %v196 = vunpack.c.l.b16 %v177
    %v197 = vunpack.c.h.b16 %v177
    %v198 = vunpack.c.l.b16 %v178
    %v199 = vunpack.c.h.b16 %v178
    %v200 = vunpack.c.l.b16 %v179
    %v201 = vunpack.c.h.b16 %v179
    %v202 = vunpack.c.l.b16 %v180
    %v203 = vunpack.c.h.b16 %v180
    %v204 = vunpack.c.l.b16 %v181
    %v205 = vunpack.c.h.b16 %v181
    %v206 = vpack.c.b16 %v190, %v190
    %v207 = vpack.c.b16 %v191, %v191
    %v208 = vpack.c.b16 %v192, %v192
    %v209 = vpack.c.b16 %v193, %v193
    %v210 = vpack.c.b16 %v194, %v194
    %v211 = vpack.c.b16 %v195, %v195
    %v212 = vpack.c.b16 %v196, %v196
    %v213 = vpack.c.b16 %v197, %v197
    %v214 = vpack.c.b16 %v198, %v198
    %v215 = vpack.c.b16 %v199, %v199
    %v216 = vpack.c.b16 %v200, %v200
    %v217 = vpack.c.b16 %v201, %v201
    %v218 = vpack.c.b16 %v202, %v202
    %v219 = vpack.c.b16 %v203, %v203
    %v220 = vpack.c.b16 %v204, %v204
    %v221 = vpack.c.b16 %v205, %v205
    %238 = vst [vmem:[#allocation2] sm:$0xf] %v206
    %239 = vst [vmem:[#allocation2 + $0x4] sm:$0xf] %v207
    %240 = vst [vmem:[#allocation2 + $0x8] sm:$0xf] %v208
    %241 = vst [vmem:[#allocation2 + $0xc] sm:$0xf] %v209
    %242 = vst [vmem:[#allocation2 + $0x10] sm:$0xf] %v210
    %243 = vst [vmem:[#allocation2 + $0x14] sm:$0xf] %v211
    %244 = vst [vmem:[#allocation2 + $0x18] sm:$0xf] %v212
    %245 = vst [vmem:[#allocation2 + $0x1c] sm:$0xf] %v213
    %246 = vst [vmem:[#allocation2 + $0x20] sm:$0xf] %v214
    %247 = vst [vmem:[#allocation2 + $0x24] sm:$0xf] %v215
    %248 = vst [vmem:[#allocation2 + $0x28] sm:$0xf] %v216
    %249 = vst [vmem:[#allocation2 + $0x2c] sm:$0xf] %v217
    %250 = vst [vmem:[#allocation2 + $0x30] sm:$0xf] %v218
    %251 = vst [vmem:[#allocation2 + $0x34] sm:$0xf] %v219
    %252 = vst [vmem:[#allocation2 + $0x38] sm:$0xf] %v220
    %253 = vst [vmem:[#allocation2 + $0x3c] sm:$0xf] %v221
    %v254 = vld [vmem:[%s2] sm:$0xff]
    %v255 = vld [vmem:[%s2 + $0x8] sm:$0xff]
    %v257 = vsel %vm52, %v20, 0
    %v260 = vsel %vm52, %v21, 0
    %v263 = vsel %vm52, %v22, 0
    %v266 = vsel %vm52, %v23, 0
    %v269 = vsel %vm52, %v24, 0
    %v272 = vsel %vm52, %v25, 0
    %v275 = vsel %vm52, %v26, 0
    %v278 = vsel %vm52, %v27, 0
    %v281 = vsel %vm52, %v28, 0
    %v284 = vsel %vm52, %v29, 0
    %v287 = vsel %vm52, %v30, 0
    %v290 = vsel %vm52, %v31, 0
    %v293 = vsel %vm52, %v32, 0
    %v296 = vsel %vm52, %v33, 0
    %v299 = vsel %vm52, %v34, 0
    %v302 = vsel %vm52, %v35, 0
    %304 = vmatprep.subr.mxu0 0.0
    %v305 = vand.u32 %v254, 4294901760
    %306 = vmatpush1.msra.mxu0 %v305
    %307 = vmatprep.subr.mxu0 0.0
    %v308 = vand.u32 %v255, 4294901760
    %309 = vmatpush1.msra.mxu0 %v308
    %310 = vmatprep.subr.mxu0 0.0
    %311 = vmatpush1.msra.mxu0 0.0
    %312 = vmatprep.subr.mxu0 0.0
    %313 = vmatpush1.msra.mxu0 0.0
    %314 = vmatprep.subr.mxu0 0.0
    %315 = vmatpush1.msra.mxu0 0.0
    %316 = vmatprep.subr.mxu0 0.0
    %317 = vmatpush1.msra.mxu0 0.0
    %318 = vmatprep.subr.mxu0 0.0
    %319 = vmatpush1.msra.mxu0 0.0
    %320 = vmatprep.subr.mxu0 0.0
    %321 = vmatpush1.msra.mxu0 0.0
    %322 = vmatprep.subr.mxu0 0.0
    %323 = vmatpush1.msra.mxu0 0.0
    %324 = vmatprep.subr.mxu0 0.0
    %325 = vmatpush1.msra.mxu0 0.0
    %326 = vmatprep.subr.mxu0 0.0
    %327 = vmatpush1.msra.mxu0 0.0
    %328 = vmatprep.subr.mxu0 0.0
    %329 = vmatpush1.msra.mxu0 0.0
    %330 = vmatprep.subr.mxu0 0.0
    %331 = vmatpush1.msra.mxu0 0.0
    %332 = vmatprep.subr.mxu0 0.0
    %333 = vmatpush1.msra.mxu0 0.0
    %334 = vmatprep.subr.mxu0 0.0
    %335 = vmatpush1.msra.mxu0 0.0
    %336 = vmatprep.subr.mxu0 0.0
    %337 = vmatpush1.msra.mxu0 0.0
    %338 = vmatprep.subr.mxu0 0.0
    %339 = vmatpush1.msra.mxu0 0.0
    %340 = vmatprep.subr.mxu0 0.0
    %341 = vmatpush1.msra.mxu0 0.0
    %342 = vmatprep.subr.mxu0 0.0
    %343 = vmatpush1.msra.mxu0 0.0
    %344 = vmatprep.subr.mxu0 0.0
    %345 = vmatpush1.msra.mxu0 0.0
    %346 = vmatprep.subr.mxu0 0.0
    %347 = vmatpush1.msra.mxu0 0.0
    %348 = vmatprep.subr.mxu0 0.0
    %349 = vmatpush1.msra.mxu0 0.0
    %350 = vmatprep.subr.mxu0 0.0
    %351 = vmatpush1.msra.mxu0 0.0
    %352 = vmatprep.subr.mxu0 0.0
    %353 = vmatpush1.msra.mxu0 0.0
    %354 = vmatprep.subr.mxu0 0.0
    %355 = vmatpush1.msra.mxu0 0.0
    %356 = vmatprep.subr.mxu0 0.0
    %357 = vmatpush1.msra.mxu0 0.0
    %358 = vmatprep.subr.mxu0 0.0
    %359 = vmatpush1.msra.mxu0 0.0
    %360 = vmatprep.subr.mxu0 0.0
    %361 = vmatpush1.msra.mxu0 0.0
    %362 = vmatprep.subr.mxu0 0.0
    %363 = vmatpush1.msra.mxu0 0.0
    %364 = vmatprep.subr.mxu0 0.0
    %365 = vmatpush1.msra.mxu0 0.0
    %366 = vmatprep.subr.mxu0 0.0
    %367 = vmatpush1.msra.mxu0 0.0
    %368 = vmatprep.subr.mxu0 0.0
    %369 = vmatpush1.msra.mxu0 0.0
    %370 = vmatprep.mubr.f32.mxu0 0.0
    %v371 = vand.u32 %v257, 4294901760
    %v372 = vsub.f32 %v257, %v371
    %v373 = vand.u32 %v372, 4294901760
    %v374 = vsub.f32 %v372, %v373
    %v375 = vand.u32 %v374, 4294901760
    %376 = vmatmul.mubr.f32.gmra.mrb[0].mxu0 %v375
    %v377 = vpop.f32.mrb[0].mxu0
    %v378 = vadd.f32 0.0, %v377
    %v379 = vpop.f32.mrb[0].mxu0
    %380 = vmatprep.mubr.f32.mxu0 0.0
    %v381 = vand.u32 %v260, 4294901760
    %v382 = vsub.f32 %v260, %v381
    %v383 = vand.u32 %v382, 4294901760
    %v384 = vsub.f32 %v382, %v383
    %v385 = vand.u32 %v384, 4294901760
    %386 = vmatmul.mubr.f32.gmra.mrb[0].mxu0 %v385
    %v387 = vpop.f32.mrb[0].mxu0
    %v388 = vadd.f32 0.0, %v387
    %v389 = vpop.f32.mrb[0].mxu0
    %390 = vmatprep.mubr.f32.mxu0 0.0
    %v391 = vand.u32 %v263, 4294901760
    %v392 = vsub.f32 %v263, %v391
    %v393 = vand.u32 %v392, 4294901760
    %v394 = vsub.f32 %v392, %v393
    %v395 = vand.u32 %v394, 4294901760
    %396 = vmatmul.mubr.f32.gmra.mrb[0].mxu0 %v395
    %v397 = vpop.f32.mrb[0].mxu0
    %v398 = vadd.f32 0.0, %v397
    %v399 = vpop.f32.mrb[0].mxu0
    %400 = vmatprep.mubr.f32.mxu0 0.0
    %v401 = vand.u32 %v266, 4294901760
    %v402 = vsub.f32 %v266, %v401
    %v403 = vand.u32 %v402, 4294901760
    %v404 = vsub.f32 %v402, %v403
    %v405 = vand.u32 %v404, 4294901760
    %406 = vmatmul.mubr.f32.gmra.mrb[0].mxu0 %v405
    %v407 = vpop.f32.mrb[0].mxu0
    %v408 = vadd.f32 0.0, %v407
    %v409 = vpop.f32.mrb[0].mxu0
    %410 = vmatprep.mubr.f32.mxu0 0.0
    %v411 = vand.u32 %v269, 4294901760
    %v412 = vsub.f32 %v269, %v411
    %v413 = vand.u32 %v412, 4294901760
    %v414 = vsub.f32 %v412, %v413
    %v415 = vand.u32 %v414, 4294901760
    %416 = vmatmul.mubr.f32.gmra.mrb[0].mxu0 %v415
    %v417 = vpop.f32.mrb[0].mxu0
    %v418 = vadd.f32 0.0, %v417
    %v419 = vpop.f32.mrb[0].mxu0
    %420 = vmatprep.mubr.f32.mxu0 0.0
    %v421 = vand.u32 %v272, 4294901760
    %v422 = vsub.f32 %v272, %v421
    %v423 = vand.u32 %v422, 4294901760
    %v424 = vsub.f32 %v422, %v423
    %v425 = vand.u32 %v424, 4294901760
    %426 = vmatmul.mubr.f32.gmra.mrb[0].mxu0 %v425
    %v427 = vpop.f32.mrb[0].mxu0
    %v428 = vadd.f32 0.0, %v427
    %v429 = vpop.f32.mrb[0].mxu0
    %430 = vmatprep.mubr.f32.mxu0 0.0
    %v431 = vand.u32 %v275, 4294901760
    %v432 = vsub.f32 %v275, %v431
    %v433 = vand.u32 %v432, 4294901760
    %v434 = vsub.f32 %v432, %v433
    %v435 = vand.u32 %v434, 4294901760
    %436 = vmatmul.mubr.f32.gmra.mrb[0].mxu0 %v435
    %v437 = vpop.f32.mrb[0].mxu0
    %v438 = vadd.f32 0.0, %v437
    %v439 = vpop.f32.mrb[0].mxu0
    %440 = vmatprep.mubr.f32.mxu0 0.0
    %v441 = vand.u32 %v278, 4294901760
    %v442 = vsub.f32 %v278, %v441
    %v443 = vand.u32 %v442, 4294901760
    %v444 = vsub.f32 %v442, %v443
    %v445 = vand.u32 %v444, 4294901760
    %446 = vmatmul.mubr.f32.gmra.mrb[0].mxu0 %v445
    %v447 = vpop.f32.mrb[0].mxu0
    %v448 = vadd.f32 0.0, %v447
    %v449 = vpop.f32.mrb[0].mxu0
    %450 = vmatprep.mubr.f32.mxu0 0.0
    %v451 = vand.u32 %v281, 4294901760
    %v452 = vsub.f32 %v281, %v451
    %v453 = vand.u32 %v452, 4294901760
    %v454 = vsub.f32 %v452, %v453
    %v455 = vand.u32 %v454, 4294901760
    %456 = vmatmul.mubr.f32.gmra.mrb[0].mxu0 %v455
    %v457 = vpop.f32.mrb[0].mxu0
    %v458 = vadd.f32 0.0, %v457
    %v459 = vpop.f32.mrb[0].mxu0
    %460 = vmatprep.mubr.f32.mxu0 0.0
    %v461 = vand.u32 %v284, 4294901760
    %v462 = vsub.f32 %v284, %v461
    %v463 = vand.u32 %v462, 4294901760
    %v464 = vsub.f32 %v462, %v463
    %v465 = vand.u32 %v464, 4294901760
    %466 = vmatmul.mubr.f32.gmra.mrb[0].mxu0 %v465
    %v467 = vpop.f32.mrb[0].mxu0
    %v468 = vadd.f32 0.0, %v467
    %v469 = vpop.f32.mrb[0].mxu0
    %470 = vmatprep.mubr.f32.mxu0 0.0
    %v471 = vand.u32 %v287, 4294901760
    %v472 = vsub.f32 %v287, %v471
    %v473 = vand.u32 %v472, 4294901760
    %v474 = vsub.f32 %v472, %v473
    %v475 = vand.u32 %v474, 4294901760
    %476 = vmatmul.mubr.f32.gmra.mrb[0].mxu0 %v475
    %v477 = vpop.f32.mrb[0].mxu0
    %v478 = vadd.f32 0.0, %v477
    %v479 = vpop.f32.mrb[0].mxu0
    %480 = vmatprep.mubr.f32.mxu0 0.0
    %v481 = vand.u32 %v290, 4294901760
    %v482 = vsub.f32 %v290, %v481
    %v483 = vand.u32 %v482, 4294901760
    %v484 = vsub.f32 %v482, %v483
    %v485 = vand.u32 %v484, 4294901760
    %486 = vmatmul.mubr.f32.gmra.mrb[0].mxu0 %v485
    %v487 = vpop.f32.mrb[0].mxu0
    %v488 = vadd.f32 0.0, %v487
    %v489 = vpop.f32.mrb[0].mxu0
    %490 = vmatprep.mubr.f32.mxu0 0.0
    %v491 = vand.u32 %v293, 4294901760
    %v492 = vsub.f32 %v293, %v491
    %v493 = vand.u32 %v492, 4294901760
    %v494 = vsub.f32 %v492, %v493
    %v495 = vand.u32 %v494, 4294901760
    %496 = vmatmul.mubr.f32.gmra.mrb[0].mxu0 %v495
    %v497 = vpop.f32.mrb[0].mxu0
    %v498 = vadd.f32 0.0, %v497
    %v499 = vpop.f32.mrb[0].mxu0
    %500 = vmatprep.mubr.f32.mxu0 0.0
    %v501 = vand.u32 %v296, 4294901760
    %v502 = vsub.f32 %v296, %v501
    %v503 = vand.u32 %v502, 4294901760
    %v504 = vsub.f32 %v502, %v503
    %v505 = vand.u32 %v504, 4294901760
    %506 = vmatmul.mubr.f32.gmra.mrb[0].mxu0 %v505
    %v507 = vpop.f32.mrb[0].mxu0
    %v508 = vadd.f32 0.0, %v507
    %v509 = vpop.f32.mrb[0].mxu0
    %510 = vmatprep.mubr.f32.mxu0 0.0
    %v511 = vand.u32 %v299, 4294901760
    %v512 = vsub.f32 %v299, %v511
    %v513 = vand.u32 %v512, 4294901760
    %v514 = vsub.f32 %v512, %v513
    %v515 = vand.u32 %v514, 4294901760
    %516 = vmatmul.mubr.f32.gmra.mrb[0].mxu0 %v515
    %v517 = vpop.f32.mrb[0].mxu0
    %v518 = vadd.f32 0.0, %v517
    %v519 = vpop.f32.mrb[0].mxu0
    %520 = vmatprep.mubr.f32.mxu0 0.0
    %v521 = vand.u32 %v302, 4294901760
    %v522 = vsub.f32 %v302, %v521
    %v523 = vand.u32 %v522, 4294901760
    %v524 = vsub.f32 %v522, %v523
    %v525 = vand.u32 %v524, 4294901760
    %526 = vmatmul.mubr.f32.gmra.mrb[0].mxu0 %v525
    %v527 = vpop.f32.mrb[0].mxu0
    %v528 = vadd.f32 0.0, %v527
    %v529 = vpop.f32.mrb[0].mxu0
    %530 = vdwg.mxu0
    %531 = vmatprep.subr.mxu0 0.0
    %v532 = vand.u32 %v254, 4294901760
    %v533 = vsub.f32 %v254, %v532
    %v534 = vand.u32 %v533, 4294901760
    %v535 = vsub.f32 %v533, %v534
    %v536 = vand.u32 %v535, 4294901760
    %537 = vmatpush1.msra.mxu0 %v536
    %538 = vmatprep.subr.mxu0 0.0
    %v539 = vand.u32 %v255, 4294901760
    %v540 = vsub.f32 %v255, %v539
    %v541 = vand.u32 %v540, 4294901760
    %v542 = vsub.f32 %v540, %v541
    %v543 = vand.u32 %v542, 4294901760
    %544 = vmatpush1.msra.mxu0 %v543
    %545 = vmatprep.subr.mxu0 0.0
    %546 = vmatpush1.msra.mxu0 0.0
    %547 = vmatprep.subr.mxu0 0.0
    %548 = vmatpush1.msra.mxu0 0.0
    %549 = vmatprep.subr.mxu0 0.0
    %550 = vmatpush1.msra.mxu0 0.0
    %551 = vmatprep.subr.mxu0 0.0
    %552 = vmatpush1.msra.mxu0 0.0
    %553 = vmatprep.subr.mxu0 0.0
    %554 = vmatpush1.msra.mxu0 0.0
    %555 = vmatprep.subr.mxu0 0.0
    %556 = vmatpush1.msra.mxu0 0.0
    %557 = vmatprep.subr.mxu0 0.0
    %558 = vmatpush1.msra.mxu0 0.0
    %559 = vmatprep.subr.mxu0 0.0
    %560 = vmatpush1.msra.mxu0 0.0
    %561 = vmatprep.subr.mxu0 0.0
    %562 = vmatpush1.msra.mxu0 0.0
    %563 = vmatprep.subr.mxu0 0.0
    %564 = vmatpush1.msra.mxu0 0.0
    %565 = vmatprep.subr.mxu0 0.0
    %566 = vmatpush1.msra.mxu0 0.0
    %567 = vmatprep.subr.mxu0 0.0
    %568 = vmatpush1.msra.mxu0 0.0
    %569 = vmatprep.subr.mxu0 0.0
    %570 = vmatpush1.msra.mxu0 0.0
    %571 = vmatprep.subr.mxu0 0.0
    %572 = vmatpush1.msra.mxu0 0.0
    %573 = vmatprep.subr.mxu0 0.0
    %574 = vmatpush1.msra.mxu0 0.0
    %575 = vmatprep.subr.mxu0 0.0
    %576 = vmatpush1.msra.mxu0 0.0
    %577 = vmatprep.subr.mxu0 0.0
    %578 = vmatpush1.msra.mxu0 0.0
    %579 = vmatprep.subr.mxu0 0.0
    %580 = vmatpush1.msra.mxu0 0.0
    %581 = vmatprep.subr.mxu0 0.0
    %582 = vmatpush1.msra.mxu0 0.0
    %583 = vmatprep.subr.mxu0 0.0
    %584 = vmatpush1.msra.mxu0 0.0
    %585 = vmatprep.subr.mxu0 0.0
    %586 = vmatpush1.msra.mxu0 0.0
    %587 = vmatprep.subr.mxu0 0.0
    %588 = vmatpush1.msra.mxu0 0.0
    %589 = vmatprep.subr.mxu0 0.0
    %590 = vmatpush1.msra.mxu0 0.0
    %591 = vmatprep.subr.mxu0 0.0
    %592 = vmatpush1.msra.mxu0 0.0
    %593 = vmatprep.subr.mxu0 0.0
    %594 = vmatpush1.msra.mxu0 0.0
    %595 = vmatprep.subr.mxu0 0.0
    %596 = vmatpush1.msra.mxu0 0.0
    %597 = vmatprep.subr.mxu0 0.0
    %598 = vmatpush1.msra.mxu0 0.0
    %599 = vmatprep.subr.mxu0 0.0
    %600 = vmatpush1.msra.mxu0 0.0
    %601 = vmatprep.subr.mxu0 0.0
    %602 = vmatpush1.msra.mxu0 0.0
    %603 = vmatprep.subr.mxu0 0.0
    %604 = vmatpush1.msra.mxu0 0.0
    %605 = vmatprep.mubr.f32.mxu0 0.0
    %v606 = vand.u32 %v257, 4294901760
    %607 = vmatmul.mubr.f32.gmra.mrb[0].mxu0 %v606
    %v608 = vpop.f32.mrb[0].mxu0
    %v609 = vadd.f32 %v378, %v608
    %v610 = vpop.f32.mrb[0].mxu0
    %611 = vmatprep.mubr.f32.mxu0 0.0
    %v612 = vand.u32 %v260, 4294901760
    %613 = vmatmul.mubr.f32.gmra.mrb[0].mxu0 %v612
    %v614 = vpop.f32.mrb[0].mxu0
    %v615 = vadd.f32 %v388, %v614
    %v616 = vpop.f32.mrb[0].mxu0
    %617 = vmatprep.mubr.f32.mxu0 0.0
    %v618 = vand.u32 %v263, 4294901760
    %619 = vmatmul.mubr.f32.gmra.mrb[0].mxu0 %v618
    %v620 = vpop.f32.mrb[0].mxu0
    %v621 = vadd.f32 %v398, %v620
    %v622 = vpop.f32.mrb[0].mxu0
    %623 = vmatprep.mubr.f32.mxu0 0.0
    %v624 = vand.u32 %v266, 4294901760
    %625 = vmatmul.mubr.f32.gmra.mrb[0].mxu0 %v624
    %v626 = vpop.f32.mrb[0].mxu0
    %v627 = vadd.f32 %v408, %v626
    %v628 = vpop.f32.mrb[0].mxu0
    %629 = vmatprep.mubr.f32.mxu0 0.0
    %v630 = vand.u32 %v269, 4294901760
    %631 = vmatmul.mubr.f32.gmra.mrb[0].mxu0 %v630
    %v632 = vpop.f32.mrb[0].mxu0
    %v633 = vadd.f32 %v418, %v632
    %v634 = vpop.f32.mrb[0].mxu0
    %635 = vmatprep.mubr.f32.mxu0 0.0
    %v636 = vand.u32 %v272, 4294901760
    %637 = vmatmul.mubr.f32.gmra.mrb[0].mxu0 %v636
    %v638 = vpop.f32.mrb[0].mxu0
    %v639 = vadd.f32 %v428, %v638
    %v640 = vpop.f32.mrb[0].mxu0
    %641 = vmatprep.mubr.f32.mxu0 0.0
    %v642 = vand.u32 %v275, 4294901760
    %643 = vmatmul.mubr.f32.gmra.mrb[0].mxu0 %v642
    %v644 = vpop.f32.mrb[0].mxu0
    %v645 = vadd.f32 %v438, %v644
    %v646 = vpop.f32.mrb[0].mxu0
    %647 = vmatprep.mubr.f32.mxu0 0.0
    %v648 = vand.u32 %v278, 4294901760
    %649 = vmatmul.mubr.f32.gmra.mrb[0].mxu0 %v648
    %v650 = vpop.f32.mrb[0].mxu0
    %v651 = vadd.f32 %v448, %v650
    %v652 = vpop.f32.mrb[0].mxu0
    %653 = vmatprep.mubr.f32.mxu0 0.0
    %v654 = vand.u32 %v281, 4294901760
    %655 = vmatmul.mubr.f32.gmra.mrb[0].mxu0 %v654
    %v656 = vpop.f32.mrb[0].mxu0
    %v657 = vadd.f32 %v458, %v656
    %v658 = vpop.f32.mrb[0].mxu0
    %659 = vmatprep.mubr.f32.mxu0 0.0
    %v660 = vand.u32 %v284, 4294901760
    %661 = vmatmul.mubr.f32.gmra.mrb[0].mxu0 %v660
    %v662 = vpop.f32.mrb[0].mxu0
    %v663 = vadd.f32 %v468, %v662
    %v664 = vpop.f32.mrb[0].mxu0
    %665 = vmatprep.mubr.f32.mxu0 0.0
    %v666 = vand.u32 %v287, 4294901760
    %667 = vmatmul.mubr.f32.gmra.mrb[0].mxu0 %v666
    %v668 = vpop.f32.mrb[0].mxu0
    %v669 = vadd.f32 %v478, %v668
    %v670 = vpop.f32.mrb[0].mxu0
    %671 = vmatprep.mubr.f32.mxu0 0.0
    %v672 = vand.u32 %v290, 4294901760
    %673 = vmatmul.mubr.f32.gmra.mrb[0].mxu0 %v672
    %v674 = vpop.f32.mrb[0].mxu0
    %v675 = vadd.f32 %v488, %v674
    %v676 = vpop.f32.mrb[0].mxu0
    %677 = vmatprep.mubr.f32.mxu0 0.0
    %v678 = vand.u32 %v293, 4294901760
    %679 = vmatmul.mubr.f32.gmra.mrb[0].mxu0 %v678
    %v680 = vpop.f32.mrb[0].mxu0
    %v681 = vadd.f32 %v498, %v680
    %v682 = vpop.f32.mrb[0].mxu0
    %683 = vmatprep.mubr.f32.mxu0 0.0
    %v684 = vand.u32 %v296, 4294901760
    %685 = vmatmul.mubr.f32.gmra.mrb[0].mxu0 %v684
    %v686 = vpop.f32.mrb[0].mxu0
    %v687 = vadd.f32 %v508, %v686
    %v688 = vpop.f32.mrb[0].mxu0
    %689 = vmatprep.mubr.f32.mxu0 0.0
    %v690 = vand.u32 %v299, 4294901760
    %691 = vmatmul.mubr.f32.gmra.mrb[0].mxu0 %v690
    %v692 = vpop.f32.mrb[0].mxu0
    %v693 = vadd.f32 %v518, %v692
    %v694 = vpop.f32.mrb[0].mxu0
    %695 = vmatprep.mubr.f32.mxu0 0.0
    %v696 = vand.u32 %v302, 4294901760
    %697 = vmatmul.mubr.f32.gmra.mrb[0].mxu0 %v696
    %v698 = vpop.f32.mrb[0].mxu0
    %v699 = vadd.f32 %v528, %v698
    %v700 = vpop.f32.mrb[0].mxu0
    %701 = vdwg.mxu0
    %702 = vmatprep.subr.mxu0 0.0
    %v703 = vand.u32 %v254, 4294901760
    %v704 = vsub.f32 %v254, %v703
    %705 = vmatpush1.msra.mxu0 %v704
    %706 = vmatprep.subr.mxu0 0.0
    %v707 = vand.u32 %v255, 4294901760
    %v708 = vsub.f32 %v255, %v707
    %709 = vmatpush1.msra.mxu0 %v708
    %710 = vmatprep.subr.mxu0 0.0
    %711 = vmatpush1.msra.mxu0 0.0
    %712 = vmatprep.subr.mxu0 0.0
    %713 = vmatpush1.msra.mxu0 0.0
    %714 = vmatprep.subr.mxu0 0.0
    %715 = vmatpush1.msra.mxu0 0.0
    %716 = vmatprep.subr.mxu0 0.0
    %717 = vmatpush1.msra.mxu0 0.0
    %718 = vmatprep.subr.mxu0 0.0
    %719 = vmatpush1.msra.mxu0 0.0
    %720 = vmatprep.subr.mxu0 0.0
    %721 = vmatpush1.msra.mxu0 0.0
    %722 = vmatprep.subr.mxu0 0.0
    %723 = vmatpush1.msra.mxu0 0.0
    %724 = vmatprep.subr.mxu0 0.0
    %725 = vmatpush1.msra.mxu0 0.0
    %726 = vmatprep.subr.mxu0 0.0
    %727 = vmatpush1.msra.mxu0 0.0
    %728 = vmatprep.subr.mxu0 0.0
    %729 = vmatpush1.msra.mxu0 0.0
    %730 = vmatprep.subr.mxu0 0.0
    %731 = vmatpush1.msra.mxu0 0.0
    %732 = vmatprep.subr.mxu0 0.0
    %733 = vmatpush1.msra.mxu0 0.0
    %734 = vmatprep.subr.mxu0 0.0
    %735 = vmatpush1.msra.mxu0 0.0
    %736 = vmatprep.subr.mxu0 0.0
    %737 = vmatpush1.msra.mxu0 0.0
    %738 = vmatprep.subr.mxu0 0.0
    %739 = vmatpush1.msra.mxu0 0.0
    %740 = vmatprep.subr.mxu0 0.0
    %741 = vmatpush1.msra.mxu0 0.0
    %742 = vmatprep.subr.mxu0 0.0
    %743 = vmatpush1.msra.mxu0 0.0
    %744 = vmatprep.subr.mxu0 0.0
    %745 = vmatpush1.msra.mxu0 0.0
    %746 = vmatprep.subr.mxu0 0.0
    %747 = vmatpush1.msra.mxu0 0.0
    %748 = vmatprep.subr.mxu0 0.0
    %749 = vmatpush1.msra.mxu0 0.0
    %750 = vmatprep.subr.mxu0 0.0
    %751 = vmatpush1.msra.mxu0 0.0
    %752 = vmatprep.subr.mxu0 0.0
    %753 = vmatpush1.msra.mxu0 0.0
    %754 = vmatprep.subr.mxu0 0.0
    %755 = vmatpush1.msra.mxu0 0.0
    %756 = vmatprep.subr.mxu0 0.0
    %757 = vmatpush1.msra.mxu0 0.0
    %758 = vmatprep.subr.mxu0 0.0
    %759 = vmatpush1.msra.mxu0 0.0
    %760 = vmatprep.subr.mxu0 0.0
    %761 = vmatpush1.msra.mxu0 0.0
    %762 = vmatprep.subr.mxu0 0.0
    %763 = vmatpush1.msra.mxu0 0.0
    %764 = vmatprep.subr.mxu0 0.0
    %765 = vmatpush1.msra.mxu0 0.0
    %766 = vmatprep.subr.mxu0 0.0
    %767 = vmatpush1.msra.mxu0 0.0
    %768 = vmatprep.subr.mxu0 0.0
    %769 = vmatpush1.msra.mxu0 0.0
    %770 = vmatprep.mubr.f32.mxu0 0.0
    %v771 = vand.u32 %v257, 4294901760
    %v772 = vsub.f32 %v257, %v771
    %773 = vmatmul.mubr.f32.gmra.mrb[0].mxu0 %v772
    %v774 = vpop.f32.mrb[0].mxu0
    %v775 = vadd.f32 %v609, %v774
    %v776 = vpop.f32.mrb[0].mxu0
    %777 = vmatprep.mubr.f32.mxu0 0.0
    %v778 = vand.u32 %v260, 4294901760
    %v779 = vsub.f32 %v260, %v778
    %780 = vmatmul.mubr.f32.gmra.mrb[0].mxu0 %v779
    %v781 = vpop.f32.mrb[0].mxu0
    %v782 = vadd.f32 %v615, %v781
    %v783 = vpop.f32.mrb[0].mxu0
    %784 = vmatprep.mubr.f32.mxu0 0.0
    %v785 = vand.u32 %v263, 4294901760
    %v786 = vsub.f32 %v263, %v785
    %787 = vmatmul.mubr.f32.gmra.mrb[0].mxu0 %v786
    %v788 = vpop.f32.mrb[0].mxu0
    %v789 = vadd.f32 %v621, %v788
    %v790 = vpop.f32.mrb[0].mxu0
    %791 = vmatprep.mubr.f32.mxu0 0.0
    %v792 = vand.u32 %v266, 4294901760
    %v793 = vsub.f32 %v266, %v792
    %794 = vmatmul.mubr.f32.gmra.mrb[0].mxu0 %v793
    %v795 = vpop.f32.mrb[0].mxu0
    %v796 = vadd.f32 %v627, %v795
    %v797 = vpop.f32.mrb[0].mxu0
    %798 = vmatprep.mubr.f32.mxu0 0.0
    %v799 = vand.u32 %v269, 4294901760
    %v800 = vsub.f32 %v269, %v799
    %801 = vmatmul.mubr.f32.gmra.mrb[0].mxu0 %v800
    %v802 = vpop.f32.mrb[0].mxu0
    %v803 = vadd.f32 %v633, %v802
    %v804 = vpop.f32.mrb[0].mxu0
    %805 = vmatprep.mubr.f32.mxu0 0.0
    %v806 = vand.u32 %v272, 4294901760
    %v807 = vsub.f32 %v272, %v806
    %808 = vmatmul.mubr.f32.gmra.mrb[0].mxu0 %v807
    %v809 = vpop.f32.mrb[0].mxu0
    %v810 = vadd.f32 %v639, %v809
    %v811 = vpop.f32.mrb[0].mxu0
    %812 = vmatprep.mubr.f32.mxu0 0.0
    %v813 = vand.u32 %v275, 4294901760
    %v814 = vsub.f32 %v275, %v813
    %815 = vmatmul.mubr.f32.gmra.mrb[0].mxu0 %v814
    %v816 = vpop.f32.mrb[0].mxu0
    %v817 = vadd.f32 %v645, %v816
    %v818 = vpop.f32.mrb[0].mxu0
    %819 = vmatprep.mubr.f32.mxu0 0.0
    %v820 = vand.u32 %v278, 4294901760
    %v821 = vsub.f32 %v278, %v820
    %822 = vmatmul.mubr.f32.gmra.mrb[0].mxu0 %v821
    %v823 = vpop.f32.mrb[0].mxu0
    %v824 = vadd.f32 %v651, %v823
    %v825 = vpop.f32.mrb[0].mxu0
    %826 = vmatprep.mubr.f32.mxu0 0.0
    %v827 = vand.u32 %v281, 4294901760
    %v828 = vsub.f32 %v281, %v827
    %829 = vmatmul.mubr.f32.gmra.mrb[0].mxu0 %v828
    %v830 = vpop.f32.mrb[0].mxu0
    %v831 = vadd.f32 %v657, %v830
    %v832 = vpop.f32.mrb[0].mxu0
    %833 = vmatprep.mubr.f32.mxu0 0.0
    %v834 = vand.u32 %v284, 4294901760
    %v835 = vsub.f32 %v284, %v834
    %836 = vmatmul.mubr.f32.gmra.mrb[0].mxu0 %v835
    %v837 = vpop.f32.mrb[0].mxu0
    %v838 = vadd.f32 %v663, %v837
    %v839 = vpop.f32.mrb[0].mxu0
    %840 = vmatprep.mubr.f32.mxu0 0.0
    %v841 = vand.u32 %v287, 4294901760
    %v842 = vsub.f32 %v287, %v841
    %843 = vmatmul.mubr.f32.gmra.mrb[0].mxu0 %v842
    %v844 = vpop.f32.mrb[0].mxu0
    %v845 = vadd.f32 %v669, %v844
    %v846 = vpop.f32.mrb[0].mxu0
    %847 = vmatprep.mubr.f32.mxu0 0.0
    %v848 = vand.u32 %v290, 4294901760
    %v849 = vsub.f32 %v290, %v848
    %850 = vmatmul.mubr.f32.gmra.mrb[0].mxu0 %v849
    %v851 = vpop.f32.mrb[0].mxu0
    %v852 = vadd.f32 %v675, %v851
    %v853 = vpop.f32.mrb[0].mxu0
    %854 = vmatprep.mubr.f32.mxu0 0.0
    %v855 = vand.u32 %v293, 4294901760
    %v856 = vsub.f32 %v293, %v855
    %857 = vmatmul.mubr.f32.gmra.mrb[0].mxu0 %v856
    %v858 = vpop.f32.mrb[0].mxu0
    %v859 = vadd.f32 %v681, %v858
    %v860 = vpop.f32.mrb[0].mxu0
    %861 = vmatprep.mubr.f32.mxu0 0.0
    %v862 = vand.u32 %v296, 4294901760
    %v863 = vsub.f32 %v296, %v862
    %864 = vmatmul.mubr.f32.gmra.mrb[0].mxu0 %v863
    %v865 = vpop.f32.mrb[0].mxu0
    %v866 = vadd.f32 %v687, %v865
    %v867 = vpop.f32.mrb[0].mxu0
    %868 = vmatprep.mubr.f32.mxu0 0.0
    %v869 = vand.u32 %v299, 4294901760
    %v870 = vsub.f32 %v299, %v869
    %871 = vmatmul.mubr.f32.gmra.mrb[0].mxu0 %v870
    %v872 = vpop.f32.mrb[0].mxu0
    %v873 = vadd.f32 %v693, %v872
    %v874 = vpop.f32.mrb[0].mxu0
    %875 = vmatprep.mubr.f32.mxu0 0.0
    %v876 = vand.u32 %v302, 4294901760
    %v877 = vsub.f32 %v302, %v876
    %878 = vmatmul.mubr.f32.gmra.mrb[0].mxu0 %v877
    %v879 = vpop.f32.mrb[0].mxu0
    %v880 = vadd.f32 %v699, %v879
    %v881 = vpop.f32.mrb[0].mxu0
    %882 = vdwg.mxu0
    %883 = vmatprep.subr.mxu0 0.0
    %v884 = vand.u32 %v254, 4294901760
    %885 = vmatpush1.msra.mxu0 %v884
    %886 = vmatprep.subr.mxu0 0.0
    %v887 = vand.u32 %v255, 4294901760
    %888 = vmatpush1.msra.mxu0 %v887
    %889 = vmatprep.subr.mxu0 0.0
    %890 = vmatpush1.msra.mxu0 0.0
    %891 = vmatprep.subr.mxu0 0.0
    %892 = vmatpush1.msra.mxu0 0.0
    %893 = vmatprep.subr.mxu0 0.0
    %894 = vmatpush1.msra.mxu0 0.0
    %895 = vmatprep.subr.mxu0 0.0
    %896 = vmatpush1.msra.mxu0 0.0
    %897 = vmatprep.subr.mxu0 0.0
    %898 = vmatpush1.msra.mxu0 0.0
    %899 = vmatprep.subr.mxu0 0.0
    %900 = vmatpush1.msra.mxu0 0.0
    %901 = vmatprep.subr.mxu0 0.0
    %902 = vmatpush1.msra.mxu0 0.0
    %903 = vmatprep.subr.mxu0 0.0
    %904 = vmatpush1.msra.mxu0 0.0
    %905 = vmatprep.subr.mxu0 0.0
    %906 = vmatpush1.msra.mxu0 0.0
    %907 = vmatprep.subr.mxu0 0.0
    %908 = vmatpush1.msra.mxu0 0.0
    %909 = vmatprep.subr.mxu0 0.0
    %910 = vmatpush1.msra.mxu0 0.0
    %911 = vmatprep.subr.mxu0 0.0
    %912 = vmatpush1.msra.mxu0 0.0
    %913 = vmatprep.subr.mxu0 0.0
    %914 = vmatpush1.msra.mxu0 0.0
    %915 = vmatprep.subr.mxu0 0.0
    %916 = vmatpush1.msra.mxu0 0.0
    %917 = vmatprep.subr.mxu0 0.0
    %918 = vmatpush1.msra.mxu0 0.0
    %919 = vmatprep.subr.mxu0 0.0
    %920 = vmatpush1.msra.mxu0 0.0
    %921 = vmatprep.subr.mxu0 0.0
    %922 = vmatpush1.msra.mxu0 0.0
    %923 = vmatprep.subr.mxu0 0.0
    %924 = vmatpush1.msra.mxu0 0.0
    %925 = vmatprep.subr.mxu0 0.0
    %926 = vmatpush1.msra.mxu0 0.0
    %927 = vmatprep.subr.mxu0 0.0
    %928 = vmatpush1.msra.mxu0 0.0
    %929 = vmatprep.subr.mxu0 0.0
    %930 = vmatpush1.msra.mxu0 0.0
    %931 = vmatprep.subr.mxu0 0.0
    %932 = vmatpush1.msra.mxu0 0.0
    %933 = vmatprep.subr.mxu0 0.0
    %934 = vmatpush1.msra.mxu0 0.0
    %935 = vmatprep.subr.mxu0 0.0
    %936 = vmatpush1.msra.mxu0 0.0
    %937 = vmatprep.subr.mxu0 0.0
    %938 = vmatpush1.msra.mxu0 0.0
    %939 = vmatprep.subr.mxu0 0.0
    %940 = vmatpush1.msra.mxu0 0.0
    %941 = vmatprep.subr.mxu0 0.0
    %942 = vmatpush1.msra.mxu0 0.0
    %943 = vmatprep.subr.mxu0 0.0
    %944 = vmatpush1.msra.mxu0 0.0
    %945 = vmatprep.subr.mxu0 0.0
    %946 = vmatpush1.msra.mxu0 0.0
    %947 = vmatprep.subr.mxu0 0.0
    %948 = vmatpush1.msra.mxu0 0.0
    %949 = vmatprep.mubr.f32.mxu0 0.0
    %v950 = vand.u32 %v257, 4294901760
    %v951 = vsub.f32 %v257, %v950
    %v952 = vand.u32 %v951, 4294901760
    %953 = vmatmul.mubr.f32.gmra.mrb[0].mxu0 %v952
    %v954 = vpop.f32.mrb[0].mxu0
    %v955 = vadd.f32 %v775, %v954
    %v956 = vpop.f32.mrb[0].mxu0
    %957 = vmatprep.mubr.f32.mxu0 0.0
    %v958 = vand.u32 %v260, 4294901760
    %v959 = vsub.f32 %v260, %v958
    %v960 = vand.u32 %v959, 4294901760
    %961 = vmatmul.mubr.f32.gmra.mrb[0].mxu0 %v960
    %v962 = vpop.f32.mrb[0].mxu0
    %v963 = vadd.f32 %v782, %v962
    %v964 = vpop.f32.mrb[0].mxu0
    %965 = vmatprep.mubr.f32.mxu0 0.0
    %v966 = vand.u32 %v263, 4294901760
    %v967 = vsub.f32 %v263, %v966
    %v968 = vand.u32 %v967, 4294901760
    %969 = vmatmul.mubr.f32.gmra.mrb[0].mxu0 %v968
    %v970 = vpop.f32.mrb[0].mxu0
    %v971 = vadd.f32 %v789, %v970
    %v972 = vpop.f32.mrb[0].mxu0
    %973 = vmatprep.mubr.f32.mxu0 0.0
    %v974 = vand.u32 %v266, 4294901760
    %v975 = vsub.f32 %v266, %v974
    %v976 = vand.u32 %v975, 4294901760
    %977 = vmatmul.mubr.f32.gmra.mrb[0].mxu0 %v976
    %v978 = vpop.f32.mrb[0].mxu0
    %v979 = vadd.f32 %v796, %v978
    %v980 = vpop.f32.mrb[0].mxu0
    %981 = vmatprep.mubr.f32.mxu0 0.0
    %v982 = vand.u32 %v269, 4294901760
    %v983 = vsub.f32 %v269, %v982
    %v984 = vand.u32 %v983, 4294901760
    %985 = vmatmul.mubr.f32.gmra.mrb[0].mxu0 %v984
    %v986 = vpop.f32.mrb[0].mxu0
    %v987 = vadd.f32 %v803, %v986
    %v988 = vpop.f32.mrb[0].mxu0
    %989 = vmatprep.mubr.f32.mxu0 0.0
    %v990 = vand.u32 %v272, 4294901760
    %v991 = vsub.f32 %v272, %v990
    %v992 = vand.u32 %v991, 4294901760
    %993 = vmatmul.mubr.f32.gmra.mrb[0].mxu0 %v992
    %v994 = vpop.f32.mrb[0].mxu0
    %v995 = vadd.f32 %v810, %v994
    %v996 = vpop.f32.mrb[0].mxu0
    %997 = vmatprep.mubr.f32.mxu0 0.0
    %v998 = vand.u32 %v275, 4294901760
    %v999 = vsub.f32 %v275, %v998
    %v1000 = vand.u32 %v999, 4294901760
    %1001 = vmatmul.mubr.f32.gmra.mrb[0].mxu0 %v1000
    %v1002 = vpop.f32.mrb[0].mxu0
    %v1003 = vadd.f32 %v817, %v1002
    %v1004 = vpop.f32.mrb[0].mxu0
    %1005 = vmatprep.mubr.f32.mxu0 0.0
    %v1006 = vand.u32 %v278, 4294901760
    %v1007 = vsub.f32 %v278, %v1006
    %v1008 = vand.u32 %v1007, 4294901760
    %1009 = vmatmul.mubr.f32.gmra.mrb[0].mxu0 %v1008
    %v1010 = vpop.f32.mrb[0].mxu0
    %v1011 = vadd.f32 %v824, %v1010
    %v1012 = vpop.f32.mrb[0].mxu0
    %1013 = vmatprep.mubr.f32.mxu0 0.0
    %v1014 = vand.u32 %v281, 4294901760
    %v1015 = vsub.f32 %v281, %v1014
    %v1016 = vand.u32 %v1015, 4294901760
    %1017 = vmatmul.mubr.f32.gmra.mrb[0].mxu0 %v1016
    %v1018 = vpop.f32.mrb[0].mxu0
    %v1019 = vadd.f32 %v831, %v1018
    %v1020 = vpop.f32.mrb[0].mxu0
    %1021 = vmatprep.mubr.f32.mxu0 0.0
    %v1022 = vand.u32 %v284, 4294901760
    %v1023 = vsub.f32 %v284, %v1022
    %v1024 = vand.u32 %v1023, 4294901760
    %1025 = vmatmul.mubr.f32.gmra.mrb[0].mxu0 %v1024
    %v1026 = vpop.f32.mrb[0].mxu0
    %v1027 = vadd.f32 %v838, %v1026
    %v1028 = vpop.f32.mrb[0].mxu0
    %1029 = vmatprep.mubr.f32.mxu0 0.0
    %v1030 = vand.u32 %v287, 4294901760
    %v1031 = vsub.f32 %v287, %v1030
    %v1032 = vand.u32 %v1031, 4294901760
    %1033 = vmatmul.mubr.f32.gmra.mrb[0].mxu0 %v1032
    %v1034 = vpop.f32.mrb[0].mxu0
    %v1035 = vadd.f32 %v845, %v1034
    %v1036 = vpop.f32.mrb[0].mxu0
    %1037 = vmatprep.mubr.f32.mxu0 0.0
    %v1038 = vand.u32 %v290, 4294901760
    %v1039 = vsub.f32 %v290, %v1038
    %v1040 = vand.u32 %v1039, 4294901760
    %1041 = vmatmul.mubr.f32.gmra.mrb[0].mxu0 %v1040
    %v1042 = vpop.f32.mrb[0].mxu0
    %v1043 = vadd.f32 %v852, %v1042
    %v1044 = vpop.f32.mrb[0].mxu0
    %1045 = vmatprep.mubr.f32.mxu0 0.0
    %v1046 = vand.u32 %v293, 4294901760
    %v1047 = vsub.f32 %v293, %v1046
    %v1048 = vand.u32 %v1047, 4294901760
    %1049 = vmatmul.mubr.f32.gmra.mrb[0].mxu0 %v1048
    %v1050 = vpop.f32.mrb[0].mxu0
    %v1051 = vadd.f32 %v859, %v1050
    %v1052 = vpop.f32.mrb[0].mxu0
    %1053 = vmatprep.mubr.f32.mxu0 0.0
    %v1054 = vand.u32 %v296, 4294901760
    %v1055 = vsub.f32 %v296, %v1054
    %v1056 = vand.u32 %v1055, 4294901760
    %1057 = vmatmul.mubr.f32.gmra.mrb[0].mxu0 %v1056
    %v1058 = vpop.f32.mrb[0].mxu0
    %v1059 = vadd.f32 %v866, %v1058
    %v1060 = vpop.f32.mrb[0].mxu0
    %1061 = vmatprep.mubr.f32.mxu0 0.0
    %v1062 = vand.u32 %v299, 4294901760
    %v1063 = vsub.f32 %v299, %v1062
    %v1064 = vand.u32 %v1063, 4294901760
    %1065 = vmatmul.mubr.f32.gmra.mrb[0].mxu0 %v1064
    %v1066 = vpop.f32.mrb[0].mxu0
    %v1067 = vadd.f32 %v873, %v1066
    %v1068 = vpop.f32.mrb[0].mxu0
    %1069 = vmatprep.mubr.f32.mxu0 0.0
    %v1070 = vand.u32 %v302, 4294901760
    %v1071 = vsub.f32 %v302, %v1070
    %v1072 = vand.u32 %v1071, 4294901760
    %1073 = vmatmul.mubr.f32.gmra.mrb[0].mxu0 %v1072
    %v1074 = vpop.f32.mrb[0].mxu0
    %v1075 = vadd.f32 %v880, %v1074
    %v1076 = vpop.f32.mrb[0].mxu0
    %1077 = vdwg.mxu0
    %1078 = vmatprep.subr.mxu0 0.0
    %v1079 = vand.u32 %v254, 4294901760
    %v1080 = vsub.f32 %v254, %v1079
    %v1081 = vand.u32 %v1080, 4294901760
    %1082 = vmatpush1.msra.mxu0 %v1081
    %1083 = vmatprep.subr.mxu0 0.0
    %v1084 = vand.u32 %v255, 4294901760
    %v1085 = vsub.f32 %v255, %v1084
    %v1086 = vand.u32 %v1085, 4294901760
    %1087 = vmatpush1.msra.mxu0 %v1086
    %1088 = vmatprep.subr.mxu0 0.0
    %1089 = vmatpush1.msra.mxu0 0.0
    %1090 = vmatprep.subr.mxu0 0.0
    %1091 = vmatpush1.msra.mxu0 0.0
    %1092 = vmatprep.subr.mxu0 0.0
    %1093 = vmatpush1.msra.mxu0 0.0
    %1094 = vmatprep.subr.mxu0 0.0
    %1095 = vmatpush1.msra.mxu0 0.0
    %1096 = vmatprep.subr.mxu0 0.0
    %1097 = vmatpush1.msra.mxu0 0.0
    %1098 = vmatprep.subr.mxu0 0.0
    %1099 = vmatpush1.msra.mxu0 0.0
    %1100 = vmatprep.subr.mxu0 0.0
    %1101 = vmatpush1.msra.mxu0 0.0
    %1102 = vmatprep.subr.mxu0 0.0
    %1103 = vmatpush1.msra.mxu0 0.0
    %1104 = vmatprep.subr.mxu0 0.0
    %1105 = vmatpush1.msra.mxu0 0.0
    %1106 = vmatprep.subr.mxu0 0.0
    %1107 = vmatpush1.msra.mxu0 0.0
    %1108 = vmatprep.subr.mxu0 0.0
    %1109 = vmatpush1.msra.mxu0 0.0
    %1110 = vmatprep.subr.mxu0 0.0
    %1111 = vmatpush1.msra.mxu0 0.0
    %1112 = vmatprep.subr.mxu0 0.0
    %1113 = vmatpush1.msra.mxu0 0.0
    %1114 = vmatprep.subr.mxu0 0.0
    %1115 = vmatpush1.msra.mxu0 0.0
    %1116 = vmatprep.subr.mxu0 0.0
    %1117 = vmatpush1.msra.mxu0 0.0
    %1118 = vmatprep.subr.mxu0 0.0
    %1119 = vmatpush1.msra.mxu0 0.0
    %1120 = vmatprep.subr.mxu0 0.0
    %1121 = vmatpush1.msra.mxu0 0.0
    %1122 = vmatprep.subr.mxu0 0.0
    %1123 = vmatpush1.msra.mxu0 0.0
    %1124 = vmatprep.subr.mxu0 0.0
    %1125 = vmatpush1.msra.mxu0 0.0
    %1126 = vmatprep.subr.mxu0 0.0
    %1127 = vmatpush1.msra.mxu0 0.0
    %1128 = vmatprep.subr.mxu0 0.0
    %1129 = vmatpush1.msra.mxu0 0.0
    %1130 = vmatprep.subr.mxu0 0.0
    %1131 = vmatpush1.msra.mxu0 0.0
    %1132 = vmatprep.subr.mxu0 0.0
    %1133 = vmatpush1.msra.mxu0 0.0
    %1134 = vmatprep.subr.mxu0 0.0
    %1135 = vmatpush1.msra.mxu0 0.0
    %1136 = vmatprep.subr.mxu0 0.0
    %1137 = vmatpush1.msra.mxu0 0.0
    %1138 = vmatprep.subr.mxu0 0.0
    %1139 = vmatpush1.msra.mxu0 0.0
    %1140 = vmatprep.subr.mxu0 0.0
    %1141 = vmatpush1.msra.mxu0 0.0
    %1142 = vmatprep.subr.mxu0 0.0
    %1143 = vmatpush1.msra.mxu0 0.0
    %1144 = vmatprep.subr.mxu0 0.0
    %1145 = vmatpush1.msra.mxu0 0.0
    %1146 = vmatprep.subr.mxu0 0.0
    %1147 = vmatpush1.msra.mxu0 0.0
    %1148 = vmatprep.mubr.f32.mxu0 0.0
    %v1149 = vand.u32 %v257, 4294901760
    %1150 = vmatmul.mubr.f32.gmra.mrb[0].mxu0 %v1149
    %v1151 = vpop.f32.mrb[0].mxu0
    %v1152 = vadd.f32 %v955, %v1151
    %v1153 = vpop.f32.mrb[0].mxu0
    %1154 = vmatprep.mubr.f32.mxu0 0.0
    %v1155 = vand.u32 %v260, 4294901760
    %1156 = vmatmul.mubr.f32.gmra.mrb[0].mxu0 %v1155
    %v1157 = vpop.f32.mrb[0].mxu0
    %v1158 = vadd.f32 %v963, %v1157
    %v1159 = vpop.f32.mrb[0].mxu0
    %1160 = vmatprep.mubr.f32.mxu0 0.0
    %v1161 = vand.u32 %v263, 4294901760
    %1162 = vmatmul.mubr.f32.gmra.mrb[0].mxu0 %v1161
    %v1163 = vpop.f32.mrb[0].mxu0
    %v1164 = vadd.f32 %v971, %v1163
    %v1165 = vpop.f32.mrb[0].mxu0
    %1166 = vmatprep.mubr.f32.mxu0 0.0
    %v1167 = vand.u32 %v266, 4294901760
    %1168 = vmatmul.mubr.f32.gmra.mrb[0].mxu0 %v1167
    %v1169 = vpop.f32.mrb[0].mxu0
    %v1170 = vadd.f32 %v979, %v1169
    %v1171 = vpop.f32.mrb[0].mxu0
    %1172 = vmatprep.mubr.f32.mxu0 0.0
    %v1173 = vand.u32 %v269, 4294901760
    %1174 = vmatmul.mubr.f32.gmra.mrb[0].mxu0 %v1173
    %v1175 = vpop.f32.mrb[0].mxu0
    %v1176 = vadd.f32 %v987, %v1175
    %v1177 = vpop.f32.mrb[0].mxu0
    %1178 = vmatprep.mubr.f32.mxu0 0.0
    %v1179 = vand.u32 %v272, 4294901760
    %1180 = vmatmul.mubr.f32.gmra.mrb[0].mxu0 %v1179
    %v1181 = vpop.f32.mrb[0].mxu0
    %v1182 = vadd.f32 %v995, %v1181
    %v1183 = vpop.f32.mrb[0].mxu0
    %1184 = vmatprep.mubr.f32.mxu0 0.0
    %v1185 = vand.u32 %v275, 4294901760
    %1186 = vmatmul.mubr.f32.gmra.mrb[0].mxu0 %v1185
    %v1187 = vpop.f32.mrb[0].mxu0
    %v1188 = vadd.f32 %v1003, %v1187
    %v1189 = vpop.f32.mrb[0].mxu0
    %1190 = vmatprep.mubr.f32.mxu0 0.0
    %v1191 = vand.u32 %v278, 4294901760
    %1192 = vmatmul.mubr.f32.gmra.mrb[0].mxu0 %v1191
    %v1193 = vpop.f32.mrb[0].mxu0
    %v1194 = vadd.f32 %v1011, %v1193
    %v1195 = vpop.f32.mrb[0].mxu0
    %1196 = vmatprep.mubr.f32.mxu0 0.0
    %v1197 = vand.u32 %v281, 4294901760
    %1198 = vmatmul.mubr.f32.gmra.mrb[0].mxu0 %v1197
    %v1199 = vpop.f32.mrb[0].mxu0
    %v1200 = vadd.f32 %v1019, %v1199
    %v1201 = vpop.f32.mrb[0].mxu0
    %1202 = vmatprep.mubr.f32.mxu0 0.0
    %v1203 = vand.u32 %v284, 4294901760
    %1204 = vmatmul.mubr.f32.gmra.mrb[0].mxu0 %v1203
    %v1205 = vpop.f32.mrb[0].mxu0
    %v1206 = vadd.f32 %v1027, %v1205
    %v1207 = vpop.f32.mrb[0].mxu0
    %1208 = vmatprep.mubr.f32.mxu0 0.0
    %v1209 = vand.u32 %v287, 4294901760
    %1210 = vmatmul.mubr.f32.gmra.mrb[0].mxu0 %v1209
    %v1211 = vpop.f32.mrb[0].mxu0
    %v1212 = vadd.f32 %v1035, %v1211
    %v1213 = vpop.f32.mrb[0].mxu0
    %1214 = vmatprep.mubr.f32.mxu0 0.0
    %v1215 = vand.u32 %v290, 4294901760
    %1216 = vmatmul.mubr.f32.gmra.mrb[0].mxu0 %v1215
    %v1217 = vpop.f32.mrb[0].mxu0
    %v1218 = vadd.f32 %v1043, %v1217
    %v1219 = vpop.f32.mrb[0].mxu0
    %1220 = vmatprep.mubr.f32.mxu0 0.0
    %v1221 = vand.u32 %v293, 4294901760
    %1222 = vmatmul.mubr.f32.gmra.mrb[0].mxu0 %v1221
    %v1223 = vpop.f32.mrb[0].mxu0
    %v1224 = vadd.f32 %v1051, %v1223
    %v1225 = vpop.f32.mrb[0].mxu0
    %1226 = vmatprep.mubr.f32.mxu0 0.0
    %v1227 = vand.u32 %v296, 4294901760
    %1228 = vmatmul.mubr.f32.gmra.mrb[0].mxu0 %v1227
    %v1229 = vpop.f32.mrb[0].mxu0
    %v1230 = vadd.f32 %v1059, %v1229
    %v1231 = vpop.f32.mrb[0].mxu0
    %1232 = vmatprep.mubr.f32.mxu0 0.0
    %v1233 = vand.u32 %v299, 4294901760
    %1234 = vmatmul.mubr.f32.gmra.mrb[0].mxu0 %v1233
    %v1235 = vpop.f32.mrb[0].mxu0
    %v1236 = vadd.f32 %v1067, %v1235
    %v1237 = vpop.f32.mrb[0].mxu0
    %1238 = vmatprep.mubr.f32.mxu0 0.0
    %v1239 = vand.u32 %v302, 4294901760
    %1240 = vmatmul.mubr.f32.gmra.mrb[0].mxu0 %v1239
    %v1241 = vpop.f32.mrb[0].mxu0
    %v1242 = vadd.f32 %v1075, %v1241
    %v1243 = vpop.f32.mrb[0].mxu0
    %1244 = vdwg.mxu0
    %1245 = vmatprep.subr.mxu0 0.0
    %v1246 = vand.u32 %v254, 4294901760
    %1247 = vmatpush1.msra.mxu0 %v1246
    %1248 = vmatprep.subr.mxu0 0.0
    %v1249 = vand.u32 %v255, 4294901760
    %1250 = vmatpush1.msra.mxu0 %v1249
    %1251 = vmatprep.subr.mxu0 0.0
    %1252 = vmatpush1.msra.mxu0 0.0
    %1253 = vmatprep.subr.mxu0 0.0
    %1254 = vmatpush1.msra.mxu0 0.0
    %1255 = vmatprep.subr.mxu0 0.0
    %1256 = vmatpush1.msra.mxu0 0.0
    %1257 = vmatprep.subr.mxu0 0.0
    %1258 = vmatpush1.msra.mxu0 0.0
    %1259 = vmatprep.subr.mxu0 0.0
    %1260 = vmatpush1.msra.mxu0 0.0
    %1261 = vmatprep.subr.mxu0 0.0
    %1262 = vmatpush1.msra.mxu0 0.0
    %1263 = vmatprep.subr.mxu0 0.0
    %1264 = vmatpush1.msra.mxu0 0.0
    %1265 = vmatprep.subr.mxu0 0.0
    %1266 = vmatpush1.msra.mxu0 0.0
    %1267 = vmatprep.subr.mxu0 0.0
    %1268 = vmatpush1.msra.mxu0 0.0
    %1269 = vmatprep.subr.mxu0 0.0
    %1270 = vmatpush1.msra.mxu0 0.0
    %1271 = vmatprep.subr.mxu0 0.0
    %1272 = vmatpush1.msra.mxu0 0.0
    %1273 = vmatprep.subr.mxu0 0.0
    %1274 = vmatpush1.msra.mxu0 0.0
    %1275 = vmatprep.subr.mxu0 0.0
    %1276 = vmatpush1.msra.mxu0 0.0
    %1277 = vmatprep.subr.mxu0 0.0
    %1278 = vmatpush1.msra.mxu0 0.0
    %1279 = vmatprep.subr.mxu0 0.0
    %1280 = vmatpush1.msra.mxu0 0.0
    %1281 = vmatprep.subr.mxu0 0.0
    %1282 = vmatpush1.msra.mxu0 0.0
    %1283 = vmatprep.subr.mxu0 0.0
    %1284 = vmatpush1.msra.mxu0 0.0
    %1285 = vmatprep.subr.mxu0 0.0
    %1286 = vmatpush1.msra.mxu0 0.0
    %1287 = vmatprep.subr.mxu0 0.0
    %1288 = vmatpush1.msra.mxu0 0.0
    %1289 = vmatprep.subr.mxu0 0.0
    %1290 = vmatpush1.msra.mxu0 0.0
    %1291 = vmatprep.subr.mxu0 0.0
    %1292 = vmatpush1.msra.mxu0 0.0
    %1293 = vmatprep.subr.mxu0 0.0
    %1294 = vmatpush1.msra.mxu0 0.0
    %1295 = vmatprep.subr.mxu0 0.0
    %1296 = vmatpush1.msra.mxu0 0.0
    %1297 = vmatprep.subr.mxu0 0.0
    %1298 = vmatpush1.msra.mxu0 0.0
    %1299 = vmatprep.subr.mxu0 0.0
    %1300 = vmatpush1.msra.mxu0 0.0
    %1301 = vmatprep.subr.mxu0 0.0
    %1302 = vmatpush1.msra.mxu0 0.0
    %1303 = vmatprep.subr.mxu0 0.0
    %1304 = vmatpush1.msra.mxu0 0.0
    %1305 = vmatprep.subr.mxu0 0.0
    %1306 = vmatpush1.msra.mxu0 0.0
    %1307 = vmatprep.subr.mxu0 0.0
    %1308 = vmatpush1.msra.mxu0 0.0
    %1309 = vmatprep.subr.mxu0 0.0
    %1310 = vmatpush1.msra.mxu0 0.0
    %1311 = vmatprep.mubr.f32.mxu0 0.0
    %v1312 = vand.u32 %v257, 4294901760
    %1313 = vmatmul.mubr.f32.gmra.mrb[0].mxu0 %v1312
    %v1314 = vpop.f32.mrb[0].mxu0
    %v1315 = vadd.f32 %v1152, %v1314
    %v1316 = vpop.f32.mrb[0].mxu0
    %1317 = vmatprep.mubr.f32.mxu0 0.0
    %v1318 = vand.u32 %v260, 4294901760
    %1319 = vmatmul.mubr.f32.gmra.mrb[0].mxu0 %v1318
    %v1320 = vpop.f32.mrb[0].mxu0
    %v1321 = vadd.f32 %v1158, %v1320
    %v1322 = vpop.f32.mrb[0].mxu0
    %1323 = vmatprep.mubr.f32.mxu0 0.0
    %v1324 = vand.u32 %v263, 4294901760
    %1325 = vmatmul.mubr.f32.gmra.mrb[0].mxu0 %v1324
    %v1326 = vpop.f32.mrb[0].mxu0
    %v1327 = vadd.f32 %v1164, %v1326
    %v1328 = vpop.f32.mrb[0].mxu0
    %1329 = vmatprep.mubr.f32.mxu0 0.0
    %v1330 = vand.u32 %v266, 4294901760
    %1331 = vmatmul.mubr.f32.gmra.mrb[0].mxu0 %v1330
    %v1332 = vpop.f32.mrb[0].mxu0
    %v1333 = vadd.f32 %v1170, %v1332
    %v1334 = vpop.f32.mrb[0].mxu0
    %1335 = vmatprep.mubr.f32.mxu0 0.0
    %v1336 = vand.u32 %v269, 4294901760
    %1337 = vmatmul.mubr.f32.gmra.mrb[0].mxu0 %v1336
    %v1338 = vpop.f32.mrb[0].mxu0
    %v1339 = vadd.f32 %v1176, %v1338
    %v1340 = vpop.f32.mrb[0].mxu0
    %1341 = vmatprep.mubr.f32.mxu0 0.0
    %v1342 = vand.u32 %v272, 4294901760
    %1343 = vmatmul.mubr.f32.gmra.mrb[0].mxu0 %v1342
    %v1344 = vpop.f32.mrb[0].mxu0
    %v1345 = vadd.f32 %v1182, %v1344
    %v1346 = vpop.f32.mrb[0].mxu0
    %1347 = vmatprep.mubr.f32.mxu0 0.0
    %v1348 = vand.u32 %v275, 4294901760
    %1349 = vmatmul.mubr.f32.gmra.mrb[0].mxu0 %v1348
    %v1350 = vpop.f32.mrb[0].mxu0
    %v1351 = vadd.f32 %v1188, %v1350
    %v1352 = vpop.f32.mrb[0].mxu0
    %1353 = vmatprep.mubr.f32.mxu0 0.0
    %v1354 = vand.u32 %v278, 4294901760
    %1355 = vmatmul.mubr.f32.gmra.mrb[0].mxu0 %v1354
    %v1356 = vpop.f32.mrb[0].mxu0
    %v1357 = vadd.f32 %v1194, %v1356
    %v1358 = vpop.f32.mrb[0].mxu0
    %1359 = vmatprep.mubr.f32.mxu0 0.0
    %v1360 = vand.u32 %v281, 4294901760
    %1361 = vmatmul.mubr.f32.gmra.mrb[0].mxu0 %v1360
    %v1362 = vpop.f32.mrb[0].mxu0
    %v1363 = vadd.f32 %v1200, %v1362
    %v1364 = vpop.f32.mrb[0].mxu0
    %1365 = vmatprep.mubr.f32.mxu0 0.0
    %v1366 = vand.u32 %v284, 4294901760
    %1367 = vmatmul.mubr.f32.gmra.mrb[0].mxu0 %v1366
    %v1368 = vpop.f32.mrb[0].mxu0
    %v1369 = vadd.f32 %v1206, %v1368
    %v1370 = vpop.f32.mrb[0].mxu0
    %1371 = vmatprep.mubr.f32.mxu0 0.0
    %v1372 = vand.u32 %v287, 4294901760
    %1373 = vmatmul.mubr.f32.gmra.mrb[0].mxu0 %v1372
    %v1374 = vpop.f32.mrb[0].mxu0
    %v1375 = vadd.f32 %v1212, %v1374
    %v1376 = vpop.f32.mrb[0].mxu0
    %1377 = vmatprep.mubr.f32.mxu0 0.0
    %v1378 = vand.u32 %v290, 4294901760
    %1379 = vmatmul.mubr.f32.gmra.mrb[0].mxu0 %v1378
    %v1380 = vpop.f32.mrb[0].mxu0
    %v1381 = vadd.f32 %v1218, %v1380
    %v1382 = vpop.f32.mrb[0].mxu0
    %1383 = vmatprep.mubr.f32.mxu0 0.0
    %v1384 = vand.u32 %v293, 4294901760
    %1385 = vmatmul.mubr.f32.gmra.mrb[0].mxu0 %v1384
    %v1386 = vpop.f32.mrb[0].mxu0
    %v1387 = vadd.f32 %v1224, %v1386
    %v1388 = vpop.f32.mrb[0].mxu0
    %1389 = vmatprep.mubr.f32.mxu0 0.0
    %v1390 = vand.u32 %v296, 4294901760
    %1391 = vmatmul.mubr.f32.gmra.mrb[0].mxu0 %v1390
    %v1392 = vpop.f32.mrb[0].mxu0
    %v1393 = vadd.f32 %v1230, %v1392
    %v1394 = vpop.f32.mrb[0].mxu0
    %1395 = vmatprep.mubr.f32.mxu0 0.0
    %v1396 = vand.u32 %v299, 4294901760
    %1397 = vmatmul.mubr.f32.gmra.mrb[0].mxu0 %v1396
    %v1398 = vpop.f32.mrb[0].mxu0
    %v1399 = vadd.f32 %v1236, %v1398
    %v1400 = vpop.f32.mrb[0].mxu0
    %1401 = vmatprep.mubr.f32.mxu0 0.0
    %v1402 = vand.u32 %v302, 4294901760
    %1403 = vmatmul.mubr.f32.gmra.mrb[0].mxu0 %v1402
    %v1404 = vpop.f32.mrb[0].mxu0
    %v1405 = vadd.f32 %v1242, %v1404
    %v1406 = vpop.f32.mrb[0].mxu0
    %1407 = vdwg.mxu0
    %vm1408 = vcmask 64512
    %1409 = vst.msk [vmem:[%s4] sm:$0xff] %vm1408, %v1315
    %1410 = vst.msk [vmem:[%s4 + $0x8] sm:$0xff] %vm1408, %v1321
    %1411 = vst.msk [vmem:[%s4 + $0x10] sm:$0xff] %vm1408, %v1327
    %1412 = vst.msk [vmem:[%s4 + $0x18] sm:$0xff] %vm1408, %v1333
    %1413 = vst.msk [vmem:[%s4 + $0x20] sm:$0xff] %vm1408, %v1339
    %1414 = vst.msk [vmem:[%s4 + $0x28] sm:$0xff] %vm1408, %v1345
    %1415 = vst.msk [vmem:[%s4 + $0x30] sm:$0xff] %vm1408, %v1351
    %1416 = vst.msk [vmem:[%s4 + $0x38] sm:$0xff] %vm1408, %v1357
    %1417 = vst.msk [vmem:[%s4 + $0x40] sm:$0xff] %vm1408, %v1363
    %1418 = vst.msk [vmem:[%s4 + $0x48] sm:$0xff] %vm1408, %v1369
    %1419 = vst.msk [vmem:[%s4 + $0x50] sm:$0xff] %vm1408, %v1375
    %1420 = vst.msk [vmem:[%s4 + $0x58] sm:$0xff] %vm1408, %v1381
    %1421 = vst.msk [vmem:[%s4 + $0x60] sm:$0xff] %vm1408, %v1387
    %1422 = vst.msk [vmem:[%s4 + $0x68] sm:$0xff] %vm1408, %v1393
    %1423 = vst.msk [vmem:[%s4 + $0x70] sm:$0xff] %vm1408, %v1399
    %1424 = vst.msk [vmem:[%s4 + $0x78] sm:$0xff] %vm1408, %v1405
    %1425 = vxpose.xlu0.b32.start [1/16] %v1315, 128
    %1426 = vxpose.xlu0.b32.cont [2/16] %v1321, 128
    %1427 = vxpose.xlu0.b32.cont [3/16] %v1327, 128
    %1428 = vxpose.xlu0.b32.cont [4/16] %v1333, 128
    %1429 = vxpose.xlu0.b32.cont [5/16] %v1339, 128
    %1430 = vxpose.xlu0.b32.cont [6/16] %v1345, 128
    %1431 = vxpose.xlu0.b32.cont [7/16] %v1351, 128
    %1432 = vxpose.xlu0.b32.cont [8/16] %v1357, 128
    %1433 = vxpose.xlu0.b32.cont [9/16] %v1363, 128
    %1434 = vxpose.xlu0.b32.cont [10/16] %v1369, 128
    %1435 = vxpose.xlu0.b32.cont [11/16] %v1375, 128
    %1436 = vxpose.xlu0.b32.cont [12/16] %v1381, 128
    %1437 = vxpose.xlu0.b32.cont [13/16] %v1387, 128
    %1438 = vxpose.xlu0.b32.cont [14/16] %v1393, 128
    %1439 = vxpose.xlu0.b32.cont [15/16] %v1399, 128
    %1440 = vxpose.xlu0.b32.end [16/16] %v1405, 128
    %v1441 = vpop.trf.xlu0
    %v1442 = vpop.trf.xlu0
    %v1443 = vpop.trf.xlu0
    %v1444 = vpop.trf.xlu0
    %v1445 = vpop.trf.xlu0
    %v1446 = vpop.trf.xlu0
    %v1447 = vpop.trf.xlu0
    %v1448 = vpop.trf.xlu0
    %v1449 = vpop.trf.xlu0
    %v1450 = vpop.trf.xlu0
    %v1451 = vpop.trf.xlu0
    %v1452 = vpop.trf.xlu0
    %v1453 = vpop.trf.xlu0
    %v1454 = vpop.trf.xlu0
    %v1455 = vpop.trf.xlu0
    %v1456 = vpop.trf.xlu0
    %1457 = vst [vmem:[#allocation4] sm:$0xff] %v1442
    // Predicated region
    $region14: #{tpu_custom_call.1} parent=1 // pred_check
      _
    $region15: #{tpu_custom_call.1} parent=1 // pred_check_branch
      %1459 = sbr.rel (0) target = $region17
    $region16: #{tpu_custom_call.1} parent=1 // pred_region
      %s1461 = ssub.s32 1024, 1024
      %1462 = vsyncadd [#allocation3], %s1461
      %s1463 = sshll.u32 [#allocation2], 4
      %s1464 = int_to_ptr.vmem [resolvable:$true] %s1463
      %1469 = dma.vmem_to_hbm [thread:$0]  %s1464, 1024, %s3, [#allocation3], 64, 64, 4
    $region17: #{tpu_custom_call.1} parent=1 // pred_fallthru
      _
    // Predicated region
    $region18: #{tpu_custom_call.1} parent=1 // pred_check
      _
    $region19: #{tpu_custom_call.1} parent=1 // pred_check_branch
      %1471 = sbr.rel (0) target = $region21
    $region20: #{tpu_custom_call.1} parent=1 // pred_region
      _
    $region21: #{tpu_custom_call.1} parent=1 // pred_fallthru
      _
    // Predicated region
    $region22: #{tpu_custom_call.1} parent=1 // pred_check
      _
    $region23: #{tpu_custom_call.1} parent=1 // pred_check_branch
      %1473 = sbr.rel (0) target = $region25
    $region24: #{tpu_custom_call.1} parent=1 // pred_region
      %s1475 = ssub.s32 128, 128
      %1476 = vsyncadd [#allocation5], %s1475
      %s1478 = sshll.u32 [#allocation4], 4
      %s1479 = int_to_ptr.vmem [resolvable:$true] %s1478
      %1481 = dma.vmem_to_hbm [thread:$0]  %s1479, 128, %s5, [#allocation5]
    $region25: #{tpu_custom_call.1} parent=1 // pred_fallthru
      _
    // Predicated region
    $region26: #{tpu_custom_call.1} parent=1 // pred_check
      _
    $region27: #{tpu_custom_call.1} parent=1 // pred_check_branch
      %1483 = sbr.rel (0) target = $region29
    $region28: #{tpu_custom_call.1} parent=1 // pred_region
      %1484 = dma.done [#allocation3], 1024
    $region29: #{tpu_custom_call.1} parent=1 // pred_fallthru
      _
    // Predicated region
    $region30: #{tpu_custom_call.1} parent=1 // pred_check
      _
    $region31: #{tpu_custom_call.1} parent=1 // pred_check_branch
      %1486 = sbr.rel (0) target = $region33
    $region32: #{tpu_custom_call.1} parent=1 // pred_region
      _
    $region33: #{tpu_custom_call.1} parent=1 // pred_fallthru
      _
    // Predicated region
    $region34: #{tpu_custom_call.1} parent=1 // pred_check
      _
    $region35: #{tpu_custom_call.1} parent=1 // pred_check_branch
      %1488 = sbr.rel (0) target = $region37
    $region36: #{tpu_custom_call.1} parent=1 // pred_region
      %1489 = dma.done [#allocation5], 128
    $region37: #{tpu_custom_call.1} parent=1 // pred_fallthru
      _
    %1490 = vsyncpa [#allocation3], 1
    %1491 = vsyncpa [#allocation5], 1

</llo_original>
